<compile_context>
chip_gen: v7x
topology: tpu7x:2x2x1
jax: 0.10.0
libtpu: 0.0.40
codegen_flags: <defaults>
</compile_context>

<pallas_src>
import math
import functools

import jax
import jax.numpy as jnp
from jax.experimental import pallas as pl
from jax.experimental.pallas import tpu as pltpu


_VMEM_LIMIT = 48 * 1024 * 1024      # leave headroom under v7x's 64 MiB physical VMEM
_COMPUTE_DTYPE = jnp.bfloat16       # MXU operand dtype (accumulation stays f32)


def _row_tile(m, target=256):
    """Largest multiple of 8 that divides m and is <= target (else m itself)."""
    if m <= target:
        return m
    t = (target // 8) * 8
    while t >= 8:
        if m % t == 0:
            return t
        t -= 8
    return m


# ----------------------------- in-kernel helpers ----------------------------

def _ln_f32(x, g, b, eps):
    mu = jnp.mean(x, axis=-1, keepdims=True)
    var = jnp.mean((x - mu) ** 2, axis=-1, keepdims=True)
    return (x - mu) * jax.lax.rsqrt(var + eps) * g + b


def _gelu_f32(x):
    # tanh-approx GELU (matches BERT-pytorch / PreSumm gelu)
    c = math.sqrt(2.0 / math.pi)
    return 0.5 * x * (1.0 + jnp.tanh(c * (x + 0.044715 * x * x * x)))


def _mha_core(xq, xkv, resid, bias,
              wq_ref, bq_ref, wk_ref, bk_ref, wv_ref, bv_ref,
              wo_ref, bo_ref, o_ref, heads, scale):
    """xq: (Lq,H) f32 normed query input; xkv: (Lk,H) f32 key/value input;
    resid: (Lq,H) f32 residual; bias: (1 or Lq, Lk) f32 additive mask."""
    cdt = wq_ref.dtype                                   # bf16 MXU operands
    q = jnp.dot(xq.astype(cdt), wq_ref[...],
                preferred_element_type=jnp.float32) + bq_ref[...]
    k = jnp.dot(xkv.astype(cdt), wk_ref[...],
                preferred_element_type=jnp.float32) + bk_ref[...]
    v = jnp.dot(xkv.astype(cdt), wv_ref[...],
                preferred_element_type=jnp.float32) + bv_ref[...]
    H = q.shape[-1]
    d = H // heads
    ctx_parts = []
    for h in range(heads):                               # static unroll over heads
        qh = q[:, h * d:(h + 1) * d].astype(cdt)         # (Lq, d)
        kh = k[:, h * d:(h + 1) * d].astype(cdt)         # (Lk, d)
        vh = v[:, h * d:(h + 1) * d].astype(cdt)         # (Lk, d)
        # q @ k^T without materializing a transpose
        s = jax.lax.dot_general(qh, kh, (((1,), (1,)), ((), ())),
                                preferred_element_type=jnp.float32) * scale
        s = s + bias                                     # broadcast to (Lq, Lk)
        s = s - jnp.max(s, axis=-1, keepdims=True)
        p = jnp.exp(s)
        p = p * pl.reciprocal(jnp.sum(p, axis=-1, keepdims=True), approx=True)
        ctx_parts.append(jnp.dot(p.astype(cdt), vh,
                                 preferred_element_type=jnp.float32))
    ctx = jnp.concatenate(ctx_parts, axis=-1)            # (Lq, H), lane-dense
    out = jnp.dot(ctx.astype(cdt), wo_ref[...],
                  preferred_element_type=jnp.float32) + bo_ref[...]
    o_ref[0] = (out + resid).astype(o_ref.dtype)         # fused residual add


# ----------------------------- Pallas kernels ------------------------------

def _self_mha_kernel(x_ref, bias_ref, g_ref, b_ref,
                     wq_ref, bq_ref, wk_ref, bk_ref, wv_ref, bv_ref,
                     wo_ref, bo_ref, o_ref, *, heads, scale, eps):
    x = x_ref[0].astype(jnp.float32)                     # (L, H)
    xn = _ln_f32(x, g_ref[...], b_ref[...], eps)
    _mha_core(xn, xn, x, bias_ref[0].astype(jnp.float32),
              wq_ref, bq_ref, wk_ref, bk_ref, wv_ref, bv_ref,
              wo_ref, bo_ref, o_ref, heads, scale)


def _cross_mha_kernel(x_ref, kv_ref, bias_ref, g_ref, b_ref,
                      wq_ref, bq_ref, wk_ref, bk_ref, wv_ref, bv_ref,
                      wo_ref, bo_ref, o_ref, *, heads, scale, eps):
    x = x_ref[0].astype(jnp.float32)                     # (Lq, H)
    xn = _ln_f32(x, g_ref[...], b_ref[...], eps)
    kv = kv_ref[0].astype(jnp.float32)                   # (Lk, H), NOT normed
    _mha_core(xn, kv, x, bias_ref[0].astype(jnp.float32),
              wq_ref, bq_ref, wk_ref, bk_ref, wv_ref, bv_ref,
              wo_ref, bo_ref, o_ref, heads, scale)


def _ffn_kernel(x_ref, g_ref, b_ref, w1_ref, b1_ref, w2_ref, b2_ref, o_ref, *, eps):
    x = x_ref[...].astype(jnp.float32)                   # (tm, H)
    xn = _ln_f32(x, g_ref[...], b_ref[...], eps)
    cdt = w1_ref.dtype
    h = jnp.dot(xn.astype(cdt), w1_ref[...],
                preferred_element_type=jnp.float32) + b1_ref[...]
    h = _gelu_f32(h)
    f = jnp.dot(h.astype(cdt), w2_ref[...],
                preferred_element_type=jnp.float32) + b2_ref[...]
    o_ref[...] = (f + x).astype(o_ref.dtype)             # fused residual add


def _layernorm_kernel(x_ref, g_ref, b_ref, o_ref, *, eps):
    o_ref[...] = _ln_f32(x_ref[...].astype(jnp.float32),
                         g_ref[...], b_ref[...], eps).astype(o_ref.dtype)


# ------------------------------ kernel wrappers ------------------------------

def fused_self_attention(x, bias, p, heads, ln_g, ln_b, eps=1e-6):
    """Returns x + OutProj(MHA(LN(x), LN(x), LN(x), bias)).

    x: (B, L, H) f32; bias: (B, Rq, L) additive f32 mask with Rq in {1, L}.
    """
    B, L, H = x.shape
    Rq = bias.shape[1]
    scale = 1.0 / math.sqrt(H // heads)
    const2 = lambda i: (0, 0)
    w_spec = pl.BlockSpec((H, H), const2)
    v_spec = pl.BlockSpec((1, H), const2)
    return pl.pallas_call(
        functools.partial(_self_mha_kernel, heads=heads, scale=scale, eps=eps),
        grid=(B,),
        in_specs=[
            pl.BlockSpec((1, L, H), lambda i: (i, 0, 0)),     # x
            pl.BlockSpec((1, Rq, L), lambda i: (i, 0, 0)),    # compact mask bias
            v_spec, v_spec,                                   # LN gamma / beta
            w_spec, v_spec, w_spec, v_spec, w_spec, v_spec,   # wq/bq wk/bk wv/bv
            w_spec, v_spec,                                   # wo / bo
        ],
        out_specs=pl.BlockSpec((1, L, H), lambda i: (i, 0, 0)),
        out_shape=jax.ShapeDtypeStruct((B, L, H), jnp.float32),
        compiler_params=pltpu.CompilerParams(
            dimension_semantics=("parallel",),
            vmem_limit_bytes=_VMEM_LIMIT),
    )(x.astype(jnp.float32), bias.astype(jnp.float32),
      ln_g.reshape(1, H).astype(jnp.float32), ln_b.reshape(1, H).astype(jnp.float32),
      p["wq"].astype(_COMPUTE_DTYPE), p["bq"].reshape(1, H).astype(jnp.float32),
      p["wk"].astype(_COMPUTE_DTYPE), p["bk"].reshape(1, H).astype(jnp.float32),
      p["wv"].astype(_COMPUTE_DTYPE), p["bv"].reshape(1, H).astype(jnp.float32),
      p["wo"].astype(_COMPUTE_DTYPE), p["bo"].reshape(1, H).astype(jnp.float32))


def fused_cross_attention(x, mem, bias, p, heads, ln_g, ln_b, eps=1e-6):
    """Returns x + OutProj(MHA(LN(x), mem, mem, bias)).  mem: (B, S, H) un-normed."""
    B, L, H = x.shape
    S = mem.shape[1]
    Rq = bias.shape[1]
    scale = 1.0 / math.sqrt(H // heads)
    const2 = lambda i: (0, 0)
    w_spec = pl.BlockSpec((H, H), const2)
    v_spec = pl.BlockSpec((1, H), const2)
    return pl.pallas_call(
        functools.partial(_cross_mha_kernel, heads=heads, scale=scale, eps=eps),
        grid=(B,),
        in_specs=[
            pl.BlockSpec((1, L, H), lambda i: (i, 0, 0)),     # x (query side)
            pl.BlockSpec((1, S, H), lambda i: (i, 0, 0)),     # mem (kv side)
            pl.BlockSpec((1, Rq, S), lambda i: (i, 0, 0)),    # compact mask bias
            v_spec, v_spec,                                   # LN gamma / beta
            w_spec, v_spec, w_spec, v_spec, w_spec, v_spec,   # wq/bq wk/bk wv/bv
            w_spec, v_spec,                                   # wo / bo
        ],
        out_specs=pl.BlockSpec((1, L, H), lambda i: (i, 0, 0)),
        out_shape=jax.ShapeDtypeStruct((B, L, H), jnp.float32),
        compiler_params=pltpu.CompilerParams(
            dimension_semantics=("parallel",),
            vmem_limit_bytes=_VMEM_LIMIT),
    )(x.astype(jnp.float32), mem.astype(jnp.float32), bias.astype(jnp.float32),
      ln_g.reshape(1, H).astype(jnp.float32), ln_b.reshape(1, H).astype(jnp.float32),
      p["wq"].astype(_COMPUTE_DTYPE), p["bq"].reshape(1, H).astype(jnp.float32),
      p["wk"].astype(_COMPUTE_DTYPE), p["bk"].reshape(1, H).astype(jnp.float32),
      p["wv"].astype(_COMPUTE_DTYPE), p["bv"].reshape(1, H).astype(jnp.float32),
      p["wo"].astype(_COMPUTE_DTYPE), p["bo"].reshape(1, H).astype(jnp.float32))


def fused_ffn(x, ln_g, ln_b, w1, b1, w2, b2, eps=1e-6):
    """x: (M, H) f32 -> x + W2(gelu(W1(LN(x)))), row-tiled over M."""
    M, H = x.shape
    FF = w1.shape[1]
    tm = _row_tile(M)
    const2 = lambda i: (0, 0)
    return pl.pallas_call(
        functools.partial(_ffn_kernel, eps=eps),
        grid=(M // tm,),
        in_specs=[
            pl.BlockSpec((tm, H), lambda i: (i, 0)),
            pl.BlockSpec((1, H), const2), pl.BlockSpec((1, H), const2),
            pl.BlockSpec((H, FF), const2), pl.BlockSpec((1, FF), const2),
            pl.BlockSpec((FF, H), const2), pl.BlockSpec((1, H), const2),
        ],
        out_specs=pl.BlockSpec((tm, H), lambda i: (i, 0)),
        out_shape=jax.ShapeDtypeStruct((M, H), jnp.float32),
        compiler_params=pltpu.CompilerParams(
            dimension_semantics=("parallel",),
            vmem_limit_bytes=_VMEM_LIMIT),
    )(x.astype(jnp.float32),
      ln_g.reshape(1, H).astype(jnp.float32), ln_b.reshape(1, H).astype(jnp.float32),
      w1.astype(_COMPUTE_DTYPE), b1.reshape(1, FF).astype(jnp.float32),
      w2.astype(_COMPUTE_DTYPE), b2.reshape(1, H).astype(jnp.float32))


def layer_norm(x, g, b, eps=1e-6):
    """x: (M, H) -> (M, H), normalized over the last axis (row-tiled)."""
    M, H = x.shape
    tm = _row_tile(M)
    const2 = lambda i: (0, 0)
    return pl.pallas_call(
        functools.partial(_layernorm_kernel, eps=eps),
        grid=(M // tm,),
        in_specs=[pl.BlockSpec((tm, H), lambda i: (i, 0)),
                  pl.BlockSpec((1, H), const2), pl.BlockSpec((1, H), const2)],
        out_specs=pl.BlockSpec((tm, H), lambda i: (i, 0)),
        out_shape=jax.ShapeDtypeStruct((M, H), jnp.float32),
        compiler_params=pltpu.CompilerParams(dimension_semantics=("parallel",)),
    )(x.astype(jnp.float32),
      g.reshape(1, H).astype(jnp.float32), b.reshape(1, H).astype(jnp.float32))


# --------------------------- model building blocks --------------------------

def sinusoidal_pe(max_len, dim):
    pos = jnp.arange(max_len, dtype=jnp.float32)[:, None]
    div = jnp.exp(jnp.arange(0, dim, 2, dtype=jnp.float32) *
                  -(math.log(10000.0) / dim))
    pe = jnp.zeros((max_len, dim), dtype=jnp.float32)
    pe = pe.at[:, 0::2].set(jnp.sin(pos * div))
    pe = pe.at[:, 1::2].set(jnp.cos(pos * div))
    return pe


def bert_encode(params, src, segs, mask_src):
    """BERT-pytorch style encoder (pre-norm transformer blocks)."""
    B, S = src.shape
    H = params["hidden"]
    x = (params["tok_emb"][src]
         + params["pe"][:S][None, :, :]
         + params["seg_emb"][segs])
    # keep-mask: 0 -> masked out with -1e9 (masked_fill(mask == 0, -1e9)); compact (B,1,S)
    enc_bias = (1.0 - mask_src.astype(jnp.float32))[:, None, :] * (-1e9)
    for lp in params["enc_layers"]:
        # x = x + MHA(LN1(x))           (fused: LN + QKV + SDPA + out-proj + residual)
        x = fused_self_attention(x, enc_bias, lp["attn"], params["heads"],
                                 lp["ln1_g"], lp["ln1_b"])
        # x = x + W2(gelu(W1(LN2(x))))  (fused FFN)
        x = fused_ffn(x.reshape(B * S, H), lp["ln2_g"], lp["ln2_b"],
                      lp["w1"], lp["b1"], lp["w2"], lp["b2"]).reshape(B, S, H)
    return x


def transformer_decode(params, tgt_in, top_vec, src):
    """PreSumm TransformerDecoder forward (no cache, full-sequence)."""
    B, Lt = tgt_in.shape
    H = params["hidden"]
    heads = params["dec_heads"]

    emb = params["dec_emb"][tgt_in]
    x = emb * math.sqrt(H) + params["pe"][:Lt][None, :, :]

    tgt_pad = (tgt_in == 0)                                       # (B, Lt)
    causal = jnp.triu(jnp.ones((Lt, Lt), dtype=jnp.int32), k=1).astype(bool)
    dec_masked = tgt_pad[:, None, :] | causal[None, :, :]         # True = masked
    dec_bias = jnp.where(dec_masked, -1e18, 0.0)                  # (B, Lt, Lt)
    src_bias = jnp.where(src == 0, -1e18, 0.0)[:, None, :]        # (B, 1, S)

    for lp in params["dec_layers"]:
        # query = x + SelfMHA(LN1(x))
        query = fused_self_attention(x, dec_bias, lp["self_attn"], heads,
                                     lp["ln1_g"], lp["ln1_b"])
        # x_in = query + CtxMHA(LN2(query), top_vec)
        x_in = fused_cross_attention(query, top_vec, src_bias, lp["ctx_attn"], heads,
                                     lp["ln2_g"], lp["ln2_b"])
        # x = x_in + W2(gelu(W1(LN_ff(x_in))))
        x = fused_ffn(x_in.reshape(B * Lt, H), lp["ln_ff_g"], lp["ln_ff_b"],
                      lp["w1"], lp["b1"], lp["w2"], lp["b2"]).reshape(B, Lt, H)

    x = layer_norm(x.reshape(B * Lt, H),
                   params["dec_ln_g"], params["dec_ln_b"]).reshape(B, Lt, H)
    return x


def abs_summarizer_forward(params, src, tgt, segs, clss, mask_src, mask_tgt, mask_cls):
    # forward() of AbsSummarizer: clss / mask_tgt / mask_cls are unused.
    top_vec = bert_encode(params, src, segs, mask_src)
    decoder_outputs = transformer_decode(params, tgt[:, :-1], top_vec, src)
    return decoder_outputs, None


# ------------------------------ parameter init -------------------------------

def init_params(key, vocab, hidden, heads, n_enc, n_dec, dec_heads, ff, max_len):
    keys = list(jax.random.split(key, 512))
    it = iter(keys)

    def nrm(shape, std=0.02):
        return (jax.random.normal(next(it), shape) * std).astype(jnp.float32)

    def attn_block():
        return {
            "wq": nrm((hidden, hidden)), "bq": jnp.zeros((hidden,), jnp.float32),
            "wk": nrm((hidden, hidden)), "bk": jnp.zeros((hidden,), jnp.float32),
            "wv": nrm((hidden, hidden)), "bv": jnp.zeros((hidden,), jnp.float32),
            "wo": nrm((hidden, hidden)), "bo": jnp.zeros((hidden,), jnp.float32),
        }

    tok_emb = nrm((vocab, hidden)).at[0].set(0.0)      # padding_idx=0
    seg_emb = nrm((3, hidden)).at[0].set(0.0)          # padding_idx=0
    dec_emb = nrm((vocab, hidden)).at[0].set(0.0)      # padding_idx=0

    enc_layers = []
    for _ in range(n_enc):
        enc_layers.append({
            "ln1_g": jnp.ones((hidden,), jnp.float32), "ln1_b": jnp.zeros((hidden,), jnp.float32),
            "attn": attn_block(),
            "ln2_g": jnp.ones((hidden,), jnp.float32), "ln2_b": jnp.zeros((hidden,), jnp.float32),
            "w1": nrm((hidden, ff)), "b1": jnp.zeros((ff,), jnp.float32),
            "w2": nrm((ff, hidden)), "b2": jnp.zeros((hidden,), jnp.float32),
        })

    dec_layers = []
    for _ in range(n_dec):
        dec_layers.append({
            "ln1_g": jnp.ones((hidden,), jnp.float32), "ln1_b": jnp.zeros((hidden,), jnp.float32),
            "self_attn": attn_block(),
            "ln2_g": jnp.ones((hidden,), jnp.float32), "ln2_b": jnp.zeros((hidden,), jnp.float32),
            "ctx_attn": attn_block(),
            "ln_ff_g": jnp.ones((hidden,), jnp.float32), "ln_ff_b": jnp.zeros((hidden,), jnp.float32),
            "w1": nrm((hidden, ff)), "b1": jnp.zeros((ff,), jnp.float32),
            "w2": nrm((ff, hidden)), "b2": jnp.zeros((hidden,), jnp.float32),
        })

    return {
        "hidden": hidden, "heads": heads, "dec_heads": dec_heads,
        "tok_emb": tok_emb, "seg_emb": seg_emb, "dec_emb": dec_emb,
        "pe": sinusoidal_pe(max_len, hidden),
        "enc_layers": enc_layers, "dec_layers": dec_layers,
        "dec_ln_g": jnp.ones((hidden,), jnp.float32),
        "dec_ln_b": jnp.zeros((hidden,), jnp.float32),
    }


# ----------------------------------- main ------------------------------------

if __name__ == "__main__":
    VOCAB, HIDDEN, HEADS = 128, 32, 4
    N_ENC, N_DEC, DEC_HEADS, FF = 2, 2, 4, 128
    B, S, LT = 2, 16, 9            # src len 16, tgt len 9 -> decoder input len 8
    MAX_LEN = 64

    key = jax.random.PRNGKey(0)
    pkey, k1, k2, k3 = jax.random.split(key, 4)

    params = init_params(pkey, VOCAB, HIDDEN, HEADS, N_ENC, N_DEC, DEC_HEADS, FF, MAX_LEN)

    src = jax.random.randint(k1, (B, S), 1, VOCAB)
    src = src.at[:, -3:].set(0)                         # trailing padding
    tgt = jax.random.randint(k2, (B, LT), 1, VOCAB)
    segs = jax.random.randint(k3, (B, S), 1, 3)
    segs = jnp.where(src == 0, 0, segs)
    clss = jnp.zeros((B, 1), dtype=jnp.int32)
    mask_src = (src != 0)
    mask_tgt = (tgt != 0)
    mask_cls = jnp.ones((B, 1), dtype=bool)

    decoder_outputs, none_out = abs_summarizer_forward(
        params, src, tgt, segs, clss, mask_src, mask_tgt, mask_cls)
    decoder_outputs = jax.block_until_ready(decoder_outputs)

    assert decoder_outputs.shape == (B, LT - 1, HIDDEN)
    assert none_out is None
    assert bool(jnp.all(jnp.isfinite(decoder_outputs)))
    print("KERNEL_OK")
</pallas_src>

<mosaic_0001>
module attributes {stable_mosaic.version = 11 : i64} {
  func.func @_self_mha_kernel(%arg0: i32, %arg1: memref<1x16x32xf32, #tpu.memory_space<vmem>>, %arg2: memref<1x1x16xf32, #tpu.memory_space<vmem>>, %arg3: memref<1x32xf32, #tpu.memory_space<vmem>>, %arg4: memref<1x32xf32, #tpu.memory_space<vmem>>, %arg5: memref<32x32xbf16, #tpu.memory_space<vmem>>, %arg6: memref<1x32xf32, #tpu.memory_space<vmem>>, %arg7: memref<32x32xbf16, #tpu.memory_space<vmem>>, %arg8: memref<1x32xf32, #tpu.memory_space<vmem>>, %arg9: memref<32x32xbf16, #tpu.memory_space<vmem>>, %arg10: memref<1x32xf32, #tpu.memory_space<vmem>>, %arg11: memref<32x32xbf16, #tpu.memory_space<vmem>>, %arg12: memref<1x32xf32, #tpu.memory_space<vmem>>, %arg13: memref<1x16x32xf32, #tpu.memory_space<vmem>>) attributes {dimension_semantics = [#tpu.dimension_semantics<parallel>], iteration_bounds = array<i64: 2>, scalar_prefetch = 0 : i64, scratch_operands = 0 : i64, tpu.core_type = #tpu.core_type<tc>, window_params = [{transform_indices = @transform_0, window_bounds = array<i64: 1, 16, 32>}, {transform_indices = @transform_1, window_bounds = array<i64: 1, 1, 16>}, {pipeline_mode = #tpu.pipeline_mode<synchronous>, transform_indices = @transform_2, window_bounds = array<i64: 1, 32>}, {pipeline_mode = #tpu.pipeline_mode<synchronous>, transform_indices = @transform_3, window_bounds = array<i64: 1, 32>}, {pipeline_mode = #tpu.pipeline_mode<synchronous>, transform_indices = @transform_4, window_bounds = array<i64: 32, 32>}, {pipeline_mode = #tpu.pipeline_mode<synchronous>, transform_indices = @transform_5, window_bounds = array<i64: 1, 32>}, {pipeline_mode = #tpu.pipeline_mode<synchronous>, transform_indices = @transform_6, window_bounds = array<i64: 32, 32>}, {pipeline_mode = #tpu.pipeline_mode<synchronous>, transform_indices = @transform_7, window_bounds = array<i64: 1, 32>}, {pipeline_mode = #tpu.pipeline_mode<synchronous>, transform_indices = @transform_8, window_bounds = array<i64: 32, 32>}, {pipeline_mode = #tpu.pipeline_mode<synchronous>, transform_indices = @transform_9, window_bounds = array<i64: 1, 32>}, {pipeline_mode = #tpu.pipeline_mode<synchronous>, transform_indices = @transform_10, window_bounds = array<i64: 32, 32>}, {pipeline_mode = #tpu.pipeline_mode<synchronous>, transform_indices = @transform_11, window_bounds = array<i64: 1, 32>}, {transform_indices = @transform_12, window_bounds = array<i64: 1, 16, 32>}]} {
    %c0 = arith.constant 0 : index
    %c0_0 = arith.constant 0 : index
    %c0_1 = arith.constant 0 : index
    %0 = vector.load %arg1[%c0, %c0_0, %c0_1] : memref<1x16x32xf32, #tpu.memory_space<vmem>>, vector<1x16x32xf32>
    %1 = vector.shape_cast %0 : vector<1x16x32xf32> to vector<16x32xf32>
    %c0_2 = arith.constant 0 : index
    %c0_3 = arith.constant 0 : index
    %2 = vector.load %arg3[%c0_2, %c0_3] : memref<1x32xf32, #tpu.memory_space<vmem>>, vector<1x32xf32>
    %c0_4 = arith.constant 0 : index
    %c0_5 = arith.constant 0 : index
    %3 = vector.load %arg4[%c0_4, %c0_5] : memref<1x32xf32, #tpu.memory_space<vmem>>, vector<1x32xf32>
    %cst = arith.constant dense<0.000000e+00> : vector<16xf32>
    %4 = vector.multi_reduction <add>, %1, %cst [1] : vector<16x32xf32> to vector<16xf32>
    %5 = vector.shape_cast %4 : vector<16xf32> to vector<16x1xf32>
    %cst_6 = arith.constant 3.200000e+01 : f32
    %6 = vector.broadcast %cst_6 : f32 to vector<16x1xf32>
    %7 = arith.divf %5, %6 : vector<16x1xf32>
    %8 = vector.broadcast %7 : vector<16x1xf32> to vector<16x32xf32>
    %9 = arith.subf %1, %8 : vector<16x32xf32>
    %10 = arith.mulf %9, %9 : vector<16x32xf32>
    %cst_7 = arith.constant dense<0.000000e+00> : vector<16xf32>
    %11 = vector.multi_reduction <add>, %10, %cst_7 [1] : vector<16x32xf32> to vector<16xf32>
    %12 = vector.shape_cast %11 : vector<16xf32> to vector<16x1xf32>
    %cst_8 = arith.constant 3.200000e+01 : f32
    %13 = vector.broadcast %cst_8 : f32 to vector<16x1xf32>
    %14 = arith.divf %12, %13 : vector<16x1xf32>
    %15 = vector.broadcast %7 : vector<16x1xf32> to vector<16x32xf32>
    %16 = arith.subf %1, %15 : vector<16x32xf32>
    %cst_9 = arith.constant 9.99999997E-7 : f32
    %17 = vector.broadcast %cst_9 : f32 to vector<16x1xf32>
    %18 = arith.addf %14, %17 : vector<16x1xf32>
    %19 = math.rsqrt %18 : vector<16x1xf32>
    %20 = vector.broadcast %19 : vector<16x1xf32> to vector<16x32xf32>
    %21 = arith.mulf %16, %20 : vector<16x32xf32>
    %22 = vector.broadcast %2 : vector<1x32xf32> to vector<16x32xf32>
    %23 = arith.mulf %21, %22 : vector<16x32xf32>
    %24 = vector.broadcast %3 : vector<1x32xf32> to vector<16x32xf32>
    %25 = arith.addf %23, %24 : vector<16x32xf32>
    %c0_10 = arith.constant 0 : index
    %c0_11 = arith.constant 0 : index
    %c0_12 = arith.constant 0 : index
    %26 = vector.load %arg2[%c0_10, %c0_11, %c0_12] : memref<1x1x16xf32, #tpu.memory_space<vmem>>, vector<1x1x16xf32>
    %27 = vector.shape_cast %26 : vector<1x1x16xf32> to vector<1x16xf32>
    %28 = arith.truncf %25 : vector<16x32xf32> to vector<16x32xbf16>
    %c0_13 = arith.constant 0 : index
    %c0_14 = arith.constant 0 : index
    %29 = vector.load %arg5[%c0_13, %c0_14] : memref<32x32xbf16, #tpu.memory_space<vmem>>, vector<32x32xbf16>
    %cst_15 = arith.constant dense<0.000000e+00> : vector<16x32xf32>
    %30 = tpu.matmul %28, %29, %cst_15 {dimension_numbers = #tpu.dot_dimension_numbers<[1], [0], [0], [1], [0, 0, 1, 1], [], []>} : vector<16x32xbf16>, vector<32x32xbf16>, vector<16x32xf32> -> vector<16x32xf32>
    %c0_16 = arith.constant 0 : index
    %c0_17 = arith.constant 0 : index
    %31 = vector.load %arg6[%c0_16, %c0_17] : memref<1x32xf32, #tpu.memory_space<vmem>>, vector<1x32xf32>
    %32 = vector.broadcast %31 : vector<1x32xf32> to vector<16x32xf32>
    %33 = arith.addf %30, %32 : vector<16x32xf32>
    %34 = arith.truncf %25 : vector<16x32xf32> to vector<16x32xbf16>
    %c0_18 = arith.constant 0 : index
    %c0_19 = arith.constant 0 : index
    %35 = vector.load %arg7[%c0_18, %c0_19] : memref<32x32xbf16, #tpu.memory_space<vmem>>, vector<32x32xbf16>
    %cst_20 = arith.constant dense<0.000000e+00> : vector<16x32xf32>
    %36 = tpu.matmul %34, %35, %cst_20 {dimension_numbers = #tpu.dot_dimension_numbers<[1], [0], [0], [1], [0, 0, 1, 1], [], []>} : vector<16x32xbf16>, vector<32x32xbf16>, vector<16x32xf32> -> vector<16x32xf32>
    %c0_21 = arith.constant 0 : index
    %c0_22 = arith.constant 0 : index
    %37 = vector.load %arg8[%c0_21, %c0_22] : memref<1x32xf32, #tpu.memory_space<vmem>>, vector<1x32xf32>
    %38 = vector.broadcast %37 : vector<1x32xf32> to vector<16x32xf32>
    %39 = arith.addf %36, %38 : vector<16x32xf32>
    %40 = arith.truncf %25 : vector<16x32xf32> to vector<16x32xbf16>
    %c0_23 = arith.constant 0 : index
    %c0_24 = arith.constant 0 : index
    %41 = vector.load %arg9[%c0_23, %c0_24] : memref<32x32xbf16, #tpu.memory_space<vmem>>, vector<32x32xbf16>
    %cst_25 = arith.constant dense<0.000000e+00> : vector<16x32xf32>
    %42 = tpu.matmul %40, %41, %cst_25 {dimension_numbers = #tpu.dot_dimension_numbers<[1], [0], [0], [1], [0, 0, 1, 1], [], []>} : vector<16x32xbf16>, vector<32x32xbf16>, vector<16x32xf32> -> vector<16x32xf32>
    %c0_26 = arith.constant 0 : index
    %c0_27 = arith.constant 0 : index
    %43 = vector.load %arg10[%c0_26, %c0_27] : memref<1x32xf32, #tpu.memory_space<vmem>>, vector<1x32xf32>
    %44 = vector.broadcast %43 : vector<1x32xf32> to vector<16x32xf32>
    %45 = arith.addf %42, %44 : vector<16x32xf32>
    %46 = vector.extract_strided_slice %33 {offsets = [0, 0], sizes = [16, 8], strides = [1, 1]} : vector<16x32xf32> to vector<16x8xf32>
    %47 = arith.truncf %46 : vector<16x8xf32> to vector<16x8xbf16>
    %48 = vector.extract_strided_slice %39 {offsets = [0, 0], sizes = [16, 8], strides = [1, 1]} : vector<16x32xf32> to vector<16x8xf32>
    %49 = arith.truncf %48 : vector<16x8xf32> to vector<16x8xbf16>
    %50 = vector.extract_strided_slice %45 {offsets = [0, 0], sizes = [16, 8], strides = [1, 1]} : vector<16x32xf32> to vector<16x8xf32>
    %51 = arith.truncf %50 : vector<16x8xf32> to vector<16x8xbf16>
    %cst_28 = arith.constant dense<0.000000e+00> : vector<16x16xf32>
    %52 = tpu.matmul %47, %49, %cst_28 {dimension_numbers = #tpu.dot_dimension_numbers<[1], [1], [0], [0], [0, 0, 1, 0], [], []>} : vector<16x8xbf16>, vector<16x8xbf16>, vector<16x16xf32> -> vector<16x16xf32>
    %cst_29 = arith.constant 0.353553385 : f32
    %53 = vector.broadcast %cst_29 : f32 to vector<16x16xf32>
    %54 = arith.mulf %52, %53 : vector<16x16xf32>
    %55 = vector.broadcast %27 : vector<1x16xf32> to vector<16x16xf32>
    %56 = arith.addf %54, %55 : vector<16x16xf32>
    %cst_30 = arith.constant dense<0xFF800000> : vector<16xf32>
    %57 = vector.multi_reduction <maximumf>, %56, %cst_30 [1] : vector<16x16xf32> to vector<16xf32>
    %58 = vector.shape_cast %57 : vector<16xf32> to vector<16x1xf32>
    %59 = vector.broadcast %58 : vector<16x1xf32> to vector<16x16xf32>
    %60 = arith.subf %56, %59 : vector<16x16xf32>
    %61 = math.exp %60 : vector<16x16xf32>
    %cst_31 = arith.constant dense<0.000000e+00> : vector<16xf32>
    %62 = vector.multi_reduction <add>, %61, %cst_31 [1] : vector<16x16xf32> to vector<16xf32>
    %63 = vector.shape_cast %62 : vector<16xf32> to vector<16x1xf32>
    %64 = tpu.reciprocal %63 {approx = true} : vector<16x1xf32> -> vector<16x1xf32>
    %65 = vector.broadcast %64 : vector<16x1xf32> to vector<16x16xf32>
    %66 = arith.mulf %61, %65 : vector<16x16xf32>
    %67 = arith.truncf %66 : vector<16x16xf32> to vector<16x16xbf16>
    %cst_32 = arith.constant dense<0.000000e+00> : vector<16x8xf32>
    %68 = tpu.matmul %67, %51, %cst_32 {dimension_numbers = #tpu.dot_dimension_numbers<[1], [0], [0], [1], [0, 0, 1, 1], [], []>} : vector<16x16xbf16>, vector<16x8xbf16>, vector<16x8xf32> -> vector<16x8xf32>
    %69 = vector.extract_strided_slice %33 {offsets = [0, 8], sizes = [16, 8], strides = [1, 1]} : vector<16x32xf32> to vector<16x8xf32>
    %70 = arith.truncf %69 : vector<16x8xf32> to vector<16x8xbf16>
    %71 = vector.extract_strided_slice %39 {offsets = [0, 8], sizes = [16, 8], strides = [1, 1]} : vector<16x32xf32> to vector<16x8xf32>
    %72 = arith.truncf %71 : vector<16x8xf32> to vector<16x8xbf16>
    %73 = vector.extract_strided_slice %45 {offsets = [0, 8], sizes = [16, 8], strides = [1, 1]} : vector<16x32xf32> to vector<16x8xf32>
    %74 = arith.truncf %73 : vector<16x8xf32> to vector<16x8xbf16>
    %cst_33 = arith.constant dense<0.000000e+00> : vector<16x16xf32>
    %75 = tpu.matmul %70, %72, %cst_33 {dimension_numbers = #tpu.dot_dimension_numbers<[1], [1], [0], [0], [0, 0, 1, 0], [], []>} : vector<16x8xbf16>, vector<16x8xbf16>, vector<16x16xf32> -> vector<16x16xf32>
    %cst_34 = arith.constant 0.353553385 : f32
    %76 = vector.broadcast %cst_34 : f32 to vector<16x16xf32>
    %77 = arith.mulf %75, %76 : vector<16x16xf32>
    %78 = vector.broadcast %27 : vector<1x16xf32> to vector<16x16xf32>
    %79 = arith.addf %77, %78 : vector<16x16xf32>
    %cst_35 = arith.constant dense<0xFF800000> : vector<16xf32>
    %80 = vector.multi_reduction <maximumf>, %79, %cst_35 [1] : vector<16x16xf32> to vector<16xf32>
    %81 = vector.shape_cast %80 : vector<16xf32> to vector<16x1xf32>
    %82 = vector.broadcast %81 : vector<16x1xf32> to vector<16x16xf32>
    %83 = arith.subf %79, %82 : vector<16x16xf32>
    %84 = math.exp %83 : vector<16x16xf32>
    %cst_36 = arith.constant dense<0.000000e+00> : vector<16xf32>
    %85 = vector.multi_reduction <add>, %84, %cst_36 [1] : vector<16x16xf32> to vector<16xf32>
    %86 = vector.shape_cast %85 : vector<16xf32> to vector<16x1xf32>
    %87 = tpu.reciprocal %86 {approx = true} : vector<16x1xf32> -> vector<16x1xf32>
    %88 = vector.broadcast %87 : vector<16x1xf32> to vector<16x16xf32>
    %89 = arith.mulf %84, %88 : vector<16x16xf32>
    %90 = arith.truncf %89 : vector<16x16xf32> to vector<16x16xbf16>
    %cst_37 = arith.constant dense<0.000000e+00> : vector<16x8xf32>
    %91 = tpu.matmul %90, %74, %cst_37 {dimension_numbers = #tpu.dot_dimension_numbers<[1], [0], [0], [1], [0, 0, 1, 1], [], []>} : vector<16x16xbf16>, vector<16x8xbf16>, vector<16x8xf32> -> vector<16x8xf32>
    %92 = vector.extract_strided_slice %33 {offsets = [0, 16], sizes = [16, 8], strides = [1, 1]} : vector<16x32xf32> to vector<16x8xf32>
    %93 = arith.truncf %92 : vector<16x8xf32> to vector<16x8xbf16>
    %94 = vector.extract_strided_slice %39 {offsets = [0, 16], sizes = [16, 8], strides = [1, 1]} : vector<16x32xf32> to vector<16x8xf32>
    %95 = arith.truncf %94 : vector<16x8xf32> to vector<16x8xbf16>
    %96 = vector.extract_strided_slice %45 {offsets = [0, 16], sizes = [16, 8], strides = [1, 1]} : vector<16x32xf32> to vector<16x8xf32>
    %97 = arith.truncf %96 : vector<16x8xf32> to vector<16x8xbf16>
    %cst_38 = arith.constant dense<0.000000e+00> : vector<16x16xf32>
    %98 = tpu.matmul %93, %95, %cst_38 {dimension_numbers = #tpu.dot_dimension_numbers<[1], [1], [0], [0], [0, 0, 1, 0], [], []>} : vector<16x8xbf16>, vector<16x8xbf16>, vector<16x16xf32> -> vector<16x16xf32>
    %cst_39 = arith.constant 0.353553385 : f32
    %99 = vector.broadcast %cst_39 : f32 to vector<16x16xf32>
    %100 = arith.mulf %98, %99 : vector<16x16xf32>
    %101 = vector.broadcast %27 : vector<1x16xf32> to vector<16x16xf32>
    %102 = arith.addf %100, %101 : vector<16x16xf32>
    %cst_40 = arith.constant dense<0xFF800000> : vector<16xf32>
    %103 = vector.multi_reduction <maximumf>, %102, %cst_40 [1] : vector<16x16xf32> to vector<16xf32>
    %104 = vector.shape_cast %103 : vector<16xf32> to vector<16x1xf32>
    %105 = vector.broadcast %104 : vector<16x1xf32> to vector<16x16xf32>
    %106 = arith.subf %102, %105 : vector<16x16xf32>
    %107 = math.exp %106 : vector<16x16xf32>
    %cst_41 = arith.constant dense<0.000000e+00> : vector<16xf32>
    %108 = vector.multi_reduction <add>, %107, %cst_41 [1] : vector<16x16xf32> to vector<16xf32>
    %109 = vector.shape_cast %108 : vector<16xf32> to vector<16x1xf32>
    %110 = tpu.reciprocal %109 {approx = true} : vector<16x1xf32> -> vector<16x1xf32>
    %111 = vector.broadcast %110 : vector<16x1xf32> to vector<16x16xf32>
    %112 = arith.mulf %107, %111 : vector<16x16xf32>
    %113 = arith.truncf %112 : vector<16x16xf32> to vector<16x16xbf16>
    %cst_42 = arith.constant dense<0.000000e+00> : vector<16x8xf32>
    %114 = tpu.matmul %113, %97, %cst_42 {dimension_numbers = #tpu.dot_dimension_numbers<[1], [0], [0], [1], [0, 0, 1, 1], [], []>} : vector<16x16xbf16>, vector<16x8xbf16>, vector<16x8xf32> -> vector<16x8xf32>
    %115 = vector.extract_strided_slice %33 {offsets = [0, 24], sizes = [16, 8], strides = [1, 1]} : vector<16x32xf32> to vector<16x8xf32>
    %116 = arith.truncf %115 : vector<16x8xf32> to vector<16x8xbf16>
    %117 = vector.extract_strided_slice %39 {offsets = [0, 24], sizes = [16, 8], strides = [1, 1]} : vector<16x32xf32> to vector<16x8xf32>
    %118 = arith.truncf %117 : vector<16x8xf32> to vector<16x8xbf16>
    %119 = vector.extract_strided_slice %45 {offsets = [0, 24], sizes = [16, 8], strides = [1, 1]} : vector<16x32xf32> to vector<16x8xf32>
    %120 = arith.truncf %119 : vector<16x8xf32> to vector<16x8xbf16>
    %cst_43 = arith.constant dense<0.000000e+00> : vector<16x16xf32>
    %121 = tpu.matmul %116, %118, %cst_43 {dimension_numbers = #tpu.dot_dimension_numbers<[1], [1], [0], [0], [0, 0, 1, 0], [], []>} : vector<16x8xbf16>, vector<16x8xbf16>, vector<16x16xf32> -> vector<16x16xf32>
    %cst_44 = arith.constant 0.353553385 : f32
    %122 = vector.broadcast %cst_44 : f32 to vector<16x16xf32>
    %123 = arith.mulf %121, %122 : vector<16x16xf32>
    %124 = vector.broadcast %27 : vector<1x16xf32> to vector<16x16xf32>
    %125 = arith.addf %123, %124 : vector<16x16xf32>
    %cst_45 = arith.constant dense<0xFF800000> : vector<16xf32>
    %126 = vector.multi_reduction <maximumf>, %125, %cst_45 [1] : vector<16x16xf32> to vector<16xf32>
    %127 = vector.shape_cast %126 : vector<16xf32> to vector<16x1xf32>
    %128 = vector.broadcast %127 : vector<16x1xf32> to vector<16x16xf32>
    %129 = arith.subf %125, %128 : vector<16x16xf32>
    %130 = math.exp %129 : vector<16x16xf32>
    %cst_46 = arith.constant dense<0.000000e+00> : vector<16xf32>
    %131 = vector.multi_reduction <add>, %130, %cst_46 [1] : vector<16x16xf32> to vector<16xf32>
    %132 = vector.shape_cast %131 : vector<16xf32> to vector<16x1xf32>
    %133 = tpu.reciprocal %132 {approx = true} : vector<16x1xf32> -> vector<16x1xf32>
    %134 = vector.broadcast %133 : vector<16x1xf32> to vector<16x16xf32>
    %135 = arith.mulf %130, %134 : vector<16x16xf32>
    %136 = arith.truncf %135 : vector<16x16xf32> to vector<16x16xbf16>
    %cst_47 = arith.constant dense<0.000000e+00> : vector<16x8xf32>
    %137 = tpu.matmul %136, %120, %cst_47 {dimension_numbers = #tpu.dot_dimension_numbers<[1], [0], [0], [1], [0, 0, 1, 1], [], []>} : vector<16x16xbf16>, vector<16x8xbf16>, vector<16x8xf32> -> vector<16x8xf32>
    %138 = tpu.concatenate %68, %91, %114, %137 in 1 : vector<16x8xf32>, vector<16x8xf32>, vector<16x8xf32>, vector<16x8xf32> -> vector<16x32xf32>
    %139 = arith.truncf %138 : vector<16x32xf32> to vector<16x32xbf16>
    %c0_48 = arith.constant 0 : index
    %c0_49 = arith.constant 0 : index
    %140 = vector.load %arg11[%c0_48, %c0_49] : memref<32x32xbf16, #tpu.memory_space<vmem>>, vector<32x32xbf16>
    %cst_50 = arith.constant dense<0.000000e+00> : vector<16x32xf32>
    %141 = tpu.matmul %139, %140, %cst_50 {dimension_numbers = #tpu.dot_dimension_numbers<[1], [0], [0], [1], [0, 0, 1, 1], [], []>} : vector<16x32xbf16>, vector<32x32xbf16>, vector<16x32xf32> -> vector<16x32xf32>
    %c0_51 = arith.constant 0 : index
    %c0_52 = arith.constant 0 : index
    %142 = vector.load %arg12[%c0_51, %c0_52] : memref<1x32xf32, #tpu.memory_space<vmem>>, vector<1x32xf32>
    %143 = vector.broadcast %142 : vector<1x32xf32> to vector<16x32xf32>
    %144 = arith.addf %141, %143 : vector<16x32xf32>
    %145 = arith.addf %144, %1 : vector<16x32xf32>
    %c0_53 = arith.constant 0 : index
    %c0_54 = arith.constant 0 : index
    %c0_55 = arith.constant 0 : index
    %146 = vector.load %arg13[%c0_53, %c0_54, %c0_55] : memref<1x16x32xf32, #tpu.memory_space<vmem>>, vector<1x16x32xf32>
    %147 = vector.shape_cast %146 : vector<1x16x32xf32> to vector<16x32xf32>
    %148 = vector.shape_cast %145 : vector<16x32xf32> to vector<1x16x32xf32>
    tpu.vector_store %arg13[%c0_53, %c0_54, %c0_55], %148 {strides = array<i32>} : memref<1x16x32xf32, #tpu.memory_space<vmem>>, vector<1x16x32xf32>,
    return
  }
  func.func @transform_0(%arg0: i32) -> (i32, i32, i32) {
    %c0_i32 = arith.constant 0 : i32
    %c0_i32_0 = arith.constant 0 : i32
    %c0_i32_1 = arith.constant 0 : i32
    return %arg0, %c0_i32, %c0_i32_0 : i32, i32, i32
  }
  func.func @transform_1(%arg0: i32) -> (i32, i32, i32) {
    %c0_i32 = arith.constant 0 : i32
    %c0_i32_0 = arith.constant 0 : i32
    %c0_i32_1 = arith.constant 0 : i32
    return %arg0, %c0_i32, %c0_i32_0 : i32, i32, i32
  }
  func.func @transform_2(%arg0: i32) -> (i32, i32) {
    %c0_i32 = arith.constant 0 : i32
    %c0_i32_0 = arith.constant 0 : i32
    %c0_i32_1 = arith.constant 0 : i32
    return %c0_i32, %c0_i32_0 : i32, i32
  }
  func.func @transform_3(%arg0: i32) -> (i32, i32) {
    %c0_i32 = arith.constant 0 : i32
    %c0_i32_0 = arith.constant 0 : i32
    %c0_i32_1 = arith.constant 0 : i32
    return %c0_i32, %c0_i32_0 : i32, i32
  }
  func.func @transform_4(%arg0: i32) -> (i32, i32) {
    %c0_i32 = arith.constant 0 : i32
    %c0_i32_0 = arith.constant 0 : i32
    %c0_i32_1 = arith.constant 0 : i32
    return %c0_i32, %c0_i32_0 : i32, i32
  }
  func.func @transform_5(%arg0: i32) -> (i32, i32) {
    %c0_i32 = arith.constant 0 : i32
    %c0_i32_0 = arith.constant 0 : i32
    %c0_i32_1 = arith.constant 0 : i32
    return %c0_i32, %c0_i32_0 : i32, i32
  }
  func.func @transform_6(%arg0: i32) -> (i32, i32) {
    %c0_i32 = arith.constant 0 : i32
    %c0_i32_0 = arith.constant 0 : i32
    %c0_i32_1 = arith.constant 0 : i32
    return %c0_i32, %c0_i32_0 : i32, i32
  }
  func.func @transform_7(%arg0: i32) -> (i32, i32) {
    %c0_i32 = arith.constant 0 : i32
    %c0_i32_0 = arith.constant 0 : i32
    %c0_i32_1 = arith.constant 0 : i32
    return %c0_i32, %c0_i32_0 : i32, i32
  }
  func.func @transform_8(%arg0: i32) -> (i32, i32) {
    %c0_i32 = arith.constant 0 : i32
    %c0_i32_0 = arith.constant 0 : i32
    %c0_i32_1 = arith.constant 0 : i32
    return %c0_i32, %c0_i32_0 : i32, i32
  }
  func.func @transform_9(%arg0: i32) -> (i32, i32) {
    %c0_i32 = arith.constant 0 : i32
    %c0_i32_0 = arith.constant 0 : i32
    %c0_i32_1 = arith.constant 0 : i32
    return %c0_i32, %c0_i32_0 : i32, i32
  }
  func.func @transform_10(%arg0: i32) -> (i32, i32) {
    %c0_i32 = arith.constant 0 : i32
    %c0_i32_0 = arith.constant 0 : i32
    %c0_i32_1 = arith.constant 0 : i32
    return %c0_i32, %c0_i32_0 : i32, i32
  }
  func.func @transform_11(%arg0: i32) -> (i32, i32) {
    %c0_i32 = arith.constant 0 : i32
    %c0_i32_0 = arith.constant 0 : i32
    %c0_i32_1 = arith.constant 0 : i32
    return %c0_i32, %c0_i32_0 : i32, i32
  }
  func.func @transform_12(%arg0: i32) -> (i32, i32, i32) {
    %c0_i32 = arith.constant 0 : i32
    %c0_i32_0 = arith.constant 0 : i32
    %c0_i32_1 = arith.constant 0 : i32
    return %arg0, %c0_i32, %c0_i32_0 : i32, i32, i32
  }
}

</mosaic_0001>

<llo_original>
// kernel: tpu_custom_call.1
$region0: #{tpu_custom_call.1}
  #allocation0 [shape = 'u32[]', space=smem, size = 0x4, offset = 0x4, fixed_abs, tag = 'smem constant byte address 0x4 - core index']
  #allocation1 [shape = 'u32[144,128]{1,0:T(1,128)}', space=vmem, size = 0x12000, scoped, tag = 'internal scratch']
  %s0 = inlined_call_operand.hbm [shape: f32[2,16,32], index: 0, kind: input, shape index: {}]
  %s1 = inlined_call_operand.vmem [shape: f32[2,1,16], index: 1, kind: input, shape index: {}]
  %s2 = inlined_call_operand.hbm [shape: f32[1,32], index: 2, kind: input, shape index: {}]
  %s3 = inlined_call_operand.hbm [shape: f32[1,32], index: 3, kind: input, shape index: {}]
  %s4 = inlined_call_operand.hbm [shape: bf16[32,32], index: 4, kind: input, shape index: {}]
  %s5 = inlined_call_operand.hbm [shape: f32[1,32], index: 5, kind: input, shape index: {}]
  %s6 = inlined_call_operand.vmem [shape: bf16[32,32], index: 6, kind: input, shape index: {}]
  %s7 = inlined_call_operand.hbm [shape: f32[1,32], index: 7, kind: input, shape index: {}]
  %s8 = inlined_call_operand.hbm [shape: bf16[32,32], index: 8, kind: input, shape index: {}]
  %s9 = inlined_call_operand.hbm [shape: f32[1,32], index: 9, kind: input, shape index: {}]
  %s10 = inlined_call_operand.vmem [shape: bf16[32,32], index: 10, kind: input, shape index: {}]
  %s11 = inlined_call_operand.vmem [shape: f32[1,32], index: 11, kind: input, shape index: {}]
  %s12 = inlined_call_operand.hbm [shape: f32[2,16,32], index: 12, kind: output, shape index: {}]
  %s13 = sld [smem:[#allocation0]]
  $region113: #{tpu_custom_call.1} parent=0
    _
  %s15 = ssub.s32 1, %s13
  %s16 = scalar_select 0, %s15, %s13
  $region1: #{tpu_custom_call.1} parent=0
    #allocation2 [shape = 'u8[16384]{0}', space=vmem, size = 0x4000, scoped, tag = 'input window, operand 0']
    #allocation3 [shape = 's32[2]{0}', space=sflag, size = 0x8, scoped, tag = 'scoped memory for tpu_custom_call.1']
    #allocation4 [shape = 's32[2]{0}', space=sflag, size = 0x8, scoped, tag = 'scoped memory for tpu_custom_call.1']
    #allocation5 [shape = 'u8[512]{0}', space=vmem, size = 0x400, scoped, tag = 'input window, operand 2, single buffered']
    #allocation6 [shape = 's32[1]{0}', space=sflag, size = 0x4, scoped, tag = 'scoped memory for tpu_custom_call.1']
    #allocation7 [shape = 'u8[512]{0}', space=vmem, size = 0x400, scoped, tag = 'input window, operand 3, single buffered']
    #allocation8 [shape = 'u8[8192]{0}', space=vmem, size = 0x2000, scoped, tag = 'input window, operand 4, single buffered']
    #allocation9 [shape = 's32[1]{0}', space=sflag, size = 0x4, scoped, tag = 'scoped memory for tpu_custom_call.1']
    #allocation10 [shape = 'u8[512]{0}', space=vmem, size = 0x400, scoped, tag = 'input window, operand 5, single buffered']
    #allocation11 [shape = 'u8[512]{0}', space=vmem, size = 0x400, scoped, tag = 'input window, operand 7, single buffered']
    #allocation12 [shape = 's32[1]{0}', space=sflag, size = 0x4, scoped, tag = 'scoped memory for tpu_custom_call.1']
    #allocation13 [shape = 'u8[8192]{0}', space=vmem, size = 0x2000, scoped, tag = 'input window, operand 8, single buffered']
    #allocation14 [shape = 'u8[512]{0}', space=vmem, size = 0x400, scoped, tag = 'input window, operand 9, single buffered']
    #allocation15 [shape = 's32[1]{0}', space=sflag, size = 0x4, scoped, tag = 'scoped memory for tpu_custom_call.1']
    #allocation16 [shape = 'u8[16384]{0}', space=vmem, size = 0x4000, scoped, tag = 'output window, operand 0']
    %17 = vsyncpa [#allocation3], 0
    %s18 = scalar_lea.sflag [#allocation3], 1
    %19 = vsyncpa %s18, 0
    %20 = vsyncpa [#allocation6], 0
    %21 = vsyncpa [#allocation9], 0
    %22 = vsyncpa [#allocation12], 0
    %23 = vsyncpa [#allocation15], 0
    %24 = vsyncpa [#allocation4], 0
    %s25 = scalar_lea.sflag [#allocation4], 1
    %26 = vsyncpa %s25, 0
    loop: start=0, step=1, limit=4
    $region2: #{tpu_custom_call.1} parent=1 // loop_pre_header
      _
    $region3: #{tpu_custom_call.1} parent=1 // loop_header
      %s28 = sphi 0, %s32
      %p29 = scmp.ge.s32.totalorder %s28, 4
      %s38 = sphi 0, %s40
      %s41 = sphi 0, %s38
      %s42 = sphi 0, %s41
      %s58 = sphi 0, %s42
      %s64 = sphi 0, %s66
      %s67 = sphi 0, %s64
      %s68 = sphi 0, %s67
      %s84 = sphi 0, %s68
      %s88 = sphi 0, %s88
      %s90 = sphi 0, %s88
      %s91 = sphi 0, %s90
      %s105 = sphi 0, %s91
      %s109 = sphi 0, %s109
      %s111 = sphi 0, %s109
      %s112 = sphi 0, %s111
      %s126 = sphi 0, %s112
      %s130 = sphi 0, %s130
      %s132 = sphi 0, %s130
      %s133 = sphi 0, %s132
      %s147 = sphi 0, %s133
      %s151 = sphi 0, %s151
      %s153 = sphi 0, %s151
      %s154 = sphi 0, %s153
      %s168 = sphi 0, %s154
      %s172 = sphi 0, %s172
      %s174 = sphi 0, %s172
      %s175 = sphi 0, %s174
      %s189 = sphi 0, %s175
      %s193 = sphi 0, %s193
      %s195 = sphi 0, %s193
      %s196 = sphi 0, %s195
      %s210 = sphi 0, %s196
      %s214 = sphi 0, %s214
      %s216 = sphi 0, %s214
      %s217 = sphi 0, %s216
      %s231 = sphi 0, %s217
      %s235 = sphi 0, %s235
      %s237 = sphi 0, %s235
      %s238 = sphi 0, %s237
      %s252 = sphi 0, %s238
      %s256 = sphi 0, %s256
      %s258 = sphi 0, %s256
      %s259 = sphi 0, %s258
      %s273 = sphi 0, %s259
      %s277 = sphi 0, %s277
      %s279 = sphi 0, %s277
      %s280 = sphi 0, %s279
      %s294 = sphi 0, %s280
      %s300 = sphi 0, %s302
      %s303 = sphi 0, %s300
      %s304 = sphi 0, %s303
      %s320 = sphi 0, %s304
    $region4: #{tpu_custom_call.1} parent=1 // loop_header_branch
      %31 = sbr.rel (%p29) target = $region8
    $region5: #{tpu_custom_call.1} parent=1 // loop_body
      %s33 = ssub.s32 %s28, 1
      %s34 = ssub.s32 %s28, 2
      %s35 = sadd.s32 %s28, 1
      %s36 = ssub.s32 %s28, %s35
      %p37 = scmp.eq.s32.totalorder %s36, 0
      %s39 = sadd.s32 %s38, 1
      %s40 = scalar_select %p37, %s38, %s39
      %p43 = pneg %p37
      %p44 = scmp.eq.s32.totalorder %s28, 1
      %p45 = por %p43, %p44
      %p46 = scmp.ne.s32.totalorder %s38, %s41
      %p47 = scmp.eq.s32.totalorder %s28, 0
      %p48 = por %p46, %p47
      %p49 = scmp.ne.s32.totalorder %s38, %s41
      %p50 = scmp.eq.s32.totalorder %s33, 1
      %p51 = por %p49, %p50
      %p52 = scmp.ne.s32.totalorder %s41, %s42
      %p53 = scmp.eq.s32.totalorder %s33, 0
      %p54 = por %p52, %p53
      %p55 = scmp.ne.s32.totalorder %s41, %s42
      %p56 = scmp.eq.s32.totalorder %s34, 1
      %p57 = por %p55, %p56
      %p59 = scmp.ne.s32.totalorder %s42, %s58
      %p60 = scmp.eq.s32.totalorder %s34, 0
      %p61 = por %p59, %p60
      %s62 = ssub.s32 %s28, %s35
      %p63 = scmp.eq.s32.totalorder %s62, 0
      %s65 = sadd.s32 %s64, 1
      %s66 = scalar_select %p63, %s64, %s65
      %p69 = pneg %p63
      %p70 = scmp.eq.s32.totalorder %s28, 1
      %p71 = por %p69, %p70
      %p72 = scmp.ne.s32.totalorder %s64, %s67
      %p73 = scmp.eq.s32.totalorder %s28, 0
      %p74 = por %p72, %p73
      %p75 = scmp.ne.s32.totalorder %s64, %s67
      %p76 = scmp.eq.s32.totalorder %s33, 1
      %p77 = por %p75, %p76
      %p78 = scmp.ne.s32.totalorder %s67, %s68
      %p79 = scmp.eq.s32.totalorder %s33, 0
      %p80 = por %p78, %p79
      %p81 = scmp.ne.s32.totalorder %s67, %s68
      %p82 = scmp.eq.s32.totalorder %s34, 1
      %p83 = por %p81, %p82
      %p85 = scmp.ne.s32.totalorder %s68, %s84
      %p86 = scmp.eq.s32.totalorder %s34, 0
      %p87 = por %p85, %p86
      %s89 = sadd.s32 %s88, 1
      %p92 = scmp.eq.s32.totalorder %s28, 1
      %p93 = scmp.ne.s32.totalorder %s88, %s90
      %p94 = scmp.eq.s32.totalorder %s28, 0
      %p95 = por %p93, %p94
      %p96 = scmp.ne.s32.totalorder %s88, %s90
      %p97 = scmp.eq.s32.totalorder %s33, 1
      %p98 = por %p96, %p97
      %p99 = scmp.ne.s32.totalorder %s90, %s91
      %p100 = scmp.eq.s32.totalorder %s33, 0
      %p101 = por %p99, %p100
      %p102 = scmp.ne.s32.totalorder %s90, %s91
      %p103 = scmp.eq.s32.totalorder %s34, 1
      %p104 = por %p102, %p103
      %p106 = scmp.ne.s32.totalorder %s91, %s105
      %p107 = scmp.eq.s32.totalorder %s34, 0
      %p108 = por %p106, %p107
      %s110 = sadd.s32 %s109, 1
      %p113 = scmp.eq.s32.totalorder %s28, 1
      %p114 = scmp.ne.s32.totalorder %s109, %s111
      %p115 = scmp.eq.s32.totalorder %s28, 0
      %p116 = por %p114, %p115
      %p117 = scmp.ne.s32.totalorder %s109, %s111
      %p118 = scmp.eq.s32.totalorder %s33, 1
      %p119 = por %p117, %p118
      %p120 = scmp.ne.s32.totalorder %s111, %s112
      %p121 = scmp.eq.s32.totalorder %s33, 0
      %p122 = por %p120, %p121
      %p123 = scmp.ne.s32.totalorder %s111, %s112
      %p124 = scmp.eq.s32.totalorder %s34, 1
      %p125 = por %p123, %p124
      %p127 = scmp.ne.s32.totalorder %s112, %s126
      %p128 = scmp.eq.s32.totalorder %s34, 0
      %p129 = por %p127, %p128
      %s131 = sadd.s32 %s130, 1
      %p134 = scmp.eq.s32.totalorder %s28, 1
      %p135 = scmp.ne.s32.totalorder %s130, %s132
      %p136 = scmp.eq.s32.totalorder %s28, 0
      %p137 = por %p135, %p136
      %p138 = scmp.ne.s32.totalorder %s130, %s132
      %p139 = scmp.eq.s32.totalorder %s33, 1
      %p140 = por %p138, %p139
      %p141 = scmp.ne.s32.totalorder %s132, %s133
      %p142 = scmp.eq.s32.totalorder %s33, 0
      %p143 = por %p141, %p142
      %p144 = scmp.ne.s32.totalorder %s132, %s133
      %p145 = scmp.eq.s32.totalorder %s34, 1
      %p146 = por %p144, %p145
      %p148 = scmp.ne.s32.totalorder %s133, %s147
      %p149 = scmp.eq.s32.totalorder %s34, 0
      %p150 = por %p148, %p149
      %s152 = sadd.s32 %s151, 1
      %p155 = scmp.eq.s32.totalorder %s28, 1
      %p156 = scmp.ne.s32.totalorder %s151, %s153
      %p157 = scmp.eq.s32.totalorder %s28, 0
      %p158 = por %p156, %p157
      %p159 = scmp.ne.s32.totalorder %s151, %s153
      %p160 = scmp.eq.s32.totalorder %s33, 1
      %p161 = por %p159, %p160
      %p162 = scmp.ne.s32.totalorder %s153, %s154
      %p163 = scmp.eq.s32.totalorder %s33, 0
      %p164 = por %p162, %p163
      %p165 = scmp.ne.s32.totalorder %s153, %s154
      %p166 = scmp.eq.s32.totalorder %s34, 1
      %p167 = por %p165, %p166
      %p169 = scmp.ne.s32.totalorder %s154, %s168
      %p170 = scmp.eq.s32.totalorder %s34, 0
      %p171 = por %p169, %p170
      %s173 = sadd.s32 %s172, 1
      %p176 = scmp.eq.s32.totalorder %s28, 1
      %p177 = scmp.ne.s32.totalorder %s172, %s174
      %p178 = scmp.eq.s32.totalorder %s28, 0
      %p179 = por %p177, %p178
      %p180 = scmp.ne.s32.totalorder %s172, %s174
      %p181 = scmp.eq.s32.totalorder %s33, 1
      %p182 = por %p180, %p181
      %p183 = scmp.ne.s32.totalorder %s174, %s175
      %p184 = scmp.eq.s32.totalorder %s33, 0
      %p185 = por %p183, %p184
      %p186 = scmp.ne.s32.totalorder %s174, %s175
      %p187 = scmp.eq.s32.totalorder %s34, 1
      %p188 = por %p186, %p187
      %p190 = scmp.ne.s32.totalorder %s175, %s189
      %p191 = scmp.eq.s32.totalorder %s34, 0
      %p192 = por %p190, %p191
      %s194 = sadd.s32 %s193, 1
      %p197 = scmp.eq.s32.totalorder %s28, 1
      %p198 = scmp.ne.s32.totalorder %s193, %s195
      %p199 = scmp.eq.s32.totalorder %s28, 0
      %p200 = por %p198, %p199
      %p201 = scmp.ne.s32.totalorder %s193, %s195
      %p202 = scmp.eq.s32.totalorder %s33, 1
      %p203 = por %p201, %p202
      %p204 = scmp.ne.s32.totalorder %s195, %s196
      %p205 = scmp.eq.s32.totalorder %s33, 0
      %p206 = por %p204, %p205
      %p207 = scmp.ne.s32.totalorder %s195, %s196
      %p208 = scmp.eq.s32.totalorder %s34, 1
      %p209 = por %p207, %p208
      %p211 = scmp.ne.s32.totalorder %s196, %s210
      %p212 = scmp.eq.s32.totalorder %s34, 0
      %p213 = por %p211, %p212
      %s215 = sadd.s32 %s214, 1
      %p218 = scmp.eq.s32.totalorder %s28, 1
      %p219 = scmp.ne.s32.totalorder %s214, %s216
      %p220 = scmp.eq.s32.totalorder %s28, 0
      %p221 = por %p219, %p220
      %p222 = scmp.ne.s32.totalorder %s214, %s216
      %p223 = scmp.eq.s32.totalorder %s33, 1
      %p224 = por %p222, %p223
      %p225 = scmp.ne.s32.totalorder %s216, %s217
      %p226 = scmp.eq.s32.totalorder %s33, 0
      %p227 = por %p225, %p226
      %p228 = scmp.ne.s32.totalorder %s216, %s217
      %p229 = scmp.eq.s32.totalorder %s34, 1
      %p230 = por %p228, %p229
      %p232 = scmp.ne.s32.totalorder %s217, %s231
      %p233 = scmp.eq.s32.totalorder %s34, 0
      %p234 = por %p232, %p233
      %s236 = sadd.s32 %s235, 1
      %p239 = scmp.eq.s32.totalorder %s28, 1
      %p240 = scmp.ne.s32.totalorder %s235, %s237
      %p241 = scmp.eq.s32.totalorder %s28, 0
      %p242 = por %p240, %p241
      %p243 = scmp.ne.s32.totalorder %s235, %s237
      %p244 = scmp.eq.s32.totalorder %s33, 1
      %p245 = por %p243, %p244
      %p246 = scmp.ne.s32.totalorder %s237, %s238
      %p247 = scmp.eq.s32.totalorder %s33, 0
      %p248 = por %p246, %p247
      %p249 = scmp.ne.s32.totalorder %s237, %s238
      %p250 = scmp.eq.s32.totalorder %s34, 1
      %p251 = por %p249, %p250
      %p253 = scmp.ne.s32.totalorder %s238, %s252
      %p254 = scmp.eq.s32.totalorder %s34, 0
      %p255 = por %p253, %p254
      %s257 = sadd.s32 %s256, 1
      %p260 = scmp.eq.s32.totalorder %s28, 1
      %p261 = scmp.ne.s32.totalorder %s256, %s258
      %p262 = scmp.eq.s32.totalorder %s28, 0
      %p263 = por %p261, %p262
      %p264 = scmp.ne.s32.totalorder %s256, %s258
      %p265 = scmp.eq.s32.totalorder %s33, 1
      %p266 = por %p264, %p265
      %p267 = scmp.ne.s32.totalorder %s258, %s259
      %p268 = scmp.eq.s32.totalorder %s33, 0
      %p269 = por %p267, %p268
      %p270 = scmp.ne.s32.totalorder %s258, %s259
      %p271 = scmp.eq.s32.totalorder %s34, 1
      %p272 = por %p270, %p271
      %p274 = scmp.ne.s32.totalorder %s259, %s273
      %p275 = scmp.eq.s32.totalorder %s34, 0
      %p276 = por %p274, %p275
      %s278 = sadd.s32 %s277, 1
      %p281 = scmp.eq.s32.totalorder %s28, 1
      %p282 = scmp.ne.s32.totalorder %s277, %s279
      %p283 = scmp.eq.s32.totalorder %s28, 0
      %p284 = por %p282, %p283
      %p285 = scmp.ne.s32.totalorder %s277, %s279
      %p286 = scmp.eq.s32.totalorder %s33, 1
      %p287 = por %p285, %p286
      %p288 = scmp.ne.s32.totalorder %s279, %s280
      %p289 = scmp.eq.s32.totalorder %s33, 0
      %p290 = por %p288, %p289
      %p291 = scmp.ne.s32.totalorder %s279, %s280
      %p292 = scmp.eq.s32.totalorder %s34, 1
      %p293 = por %p291, %p292
      %p295 = scmp.ne.s32.totalorder %s280, %s294
      %p296 = scmp.eq.s32.totalorder %s34, 0
      %p297 = por %p295, %p296
      %s298 = ssub.s32 %s28, %s35
      %p299 = scmp.eq.s32.totalorder %s298, 0
      %s301 = sadd.s32 %s300, 1
      %s302 = scalar_select %p299, %s300, %s301
      %p305 = pneg %p299
      %p306 = scmp.eq.s32.totalorder %s28, 1
      %p307 = por %p305, %p306
      %p308 = scmp.ne.s32.totalorder %s300, %s303
      %p309 = scmp.eq.s32.totalorder %s28, 0
      %p310 = por %p308, %p309
      %p311 = scmp.ne.s32.totalorder %s300, %s303
      %p312 = scmp.eq.s32.totalorder %s33, 1
      %p313 = por %p311, %p312
      %p314 = scmp.ne.s32.totalorder %s303, %s304
      %p315 = scmp.eq.s32.totalorder %s33, 0
      %p316 = por %p314, %p315
      %p317 = scmp.ne.s32.totalorder %s303, %s304
      %p318 = scmp.eq.s32.totalorder %s34, 1
      %p319 = por %p317, %p318
      %p321 = scmp.ne.s32.totalorder %s304, %s320
      %p322 = scmp.eq.s32.totalorder %s34, 0
      %p323 = por %p321, %p322
      %p324 = scmp.le.s32.totalorder 1, %s28
      %p325 = scmp.lt.s32.totalorder %s28, 3
      %p326 = pnand %p324, %p325
      %p327 = pneg %p326
      // Predicated region
      $region9: #{tpu_custom_call.1} parent=5 // pred_check
        _
      $region10: #{tpu_custom_call.1} parent=5 // pred_check_branch
        %329 = sbr.rel (%p326) target = $region12
      $region11: #{tpu_custom_call.1} parent=5 // pred_region
        %s330 = ssub.s32 %s28, 1
        // Predicated region
        $region13: #{tpu_custom_call.1} parent=11 // pred_check
          %p331 = pneg %p101
        $region14: #{tpu_custom_call.1} parent=11 // pred_check_branch
          %333 = sbr.rel (%p331) target = $region16
        $region15: #{tpu_custom_call.1} parent=11 // pred_region
          %s335 = ssub.s32 16, 16
          %336 = vsyncadd [#allocation6], %s335
          %s338 = sshll.u32 [#allocation5], 4
          %s339 = int_to_ptr.vmem [resolvable:$true] %s338
          %341 = dma.hbm_to_vmem [thread:$0]  %s2, 16, %s339, [#allocation6]
        $region16: #{tpu_custom_call.1} parent=11 // pred_fallthru
          _
        // Predicated region
        $region17: #{tpu_custom_call.1} parent=11 // pred_check
          %p342 = pneg %p122
        $region18: #{tpu_custom_call.1} parent=11 // pred_check_branch
          %344 = sbr.rel (%p342) target = $region20
        $region19: #{tpu_custom_call.1} parent=11 // pred_region
          %s346 = ssub.s32 16, 16
          %347 = vsyncadd [#allocation6], %s346
          %s349 = sshll.u32 [#allocation7], 4
          %s350 = int_to_ptr.vmem [resolvable:$true] %s349
          %352 = dma.hbm_to_vmem [thread:$0]  %s3, 16, %s350, [#allocation6]
        $region20: #{tpu_custom_call.1} parent=11 // pred_fallthru
          _
        // Predicated region
        $region21: #{tpu_custom_call.1} parent=11 // pred_check
          %p353 = pneg %p143
        $region22: #{tpu_custom_call.1} parent=11 // pred_check_branch
          %355 = sbr.rel (%p353) target = $region24
        $region23: #{tpu_custom_call.1} parent=11 // pred_region
          %s357 = ssub.s32 256, 256
          %358 = vsyncadd [#allocation9], %s357
          %s359 = sshll.u32 [#allocation8], 4
          %s360 = int_to_ptr.vmem [resolvable:$true] %s359
          %365 = dma.hbm_to_vmem [thread:$0]  %s4, 256, %s360, [#allocation9], 64, 64, 4
        $region24: #{tpu_custom_call.1} parent=11 // pred_fallthru
          _
        // Predicated region
        $region25: #{tpu_custom_call.1} parent=11 // pred_check
          %p366 = pneg %p164
        $region26: #{tpu_custom_call.1} parent=11 // pred_check_branch
          %368 = sbr.rel (%p366) target = $region28
        $region27: #{tpu_custom_call.1} parent=11 // pred_region
          %s370 = ssub.s32 16, 16
          %371 = vsyncadd [#allocation9], %s370
          %s373 = sshll.u32 [#allocation10], 4
          %s374 = int_to_ptr.vmem [resolvable:$true] %s373
          %376 = dma.hbm_to_vmem [thread:$0]  %s5, 16, %s374, [#allocation9]
        $region28: #{tpu_custom_call.1} parent=11 // pred_fallthru
          _
        // Predicated region
        $region29: #{tpu_custom_call.1} parent=11 // pred_check
          %p377 = pneg %p185
        $region30: #{tpu_custom_call.1} parent=11 // pred_check_branch
          %379 = sbr.rel (%p377) target = $region32
        $region31: #{tpu_custom_call.1} parent=11 // pred_region
          _
        $region32: #{tpu_custom_call.1} parent=11 // pred_fallthru
          _
        // Predicated region
        $region33: #{tpu_custom_call.1} parent=11 // pred_check
          %p380 = pneg %p206
        $region34: #{tpu_custom_call.1} parent=11 // pred_check_branch
          %382 = sbr.rel (%p380) target = $region36
        $region35: #{tpu_custom_call.1} parent=11 // pred_region
          %s384 = ssub.s32 16, 16
          %385 = vsyncadd [#allocation12], %s384
          %s387 = sshll.u32 [#allocation11], 4
          %s388 = int_to_ptr.vmem [resolvable:$true] %s387
          %390 = dma.hbm_to_vmem [thread:$0]  %s7, 16, %s388, [#allocation12]
        $region36: #{tpu_custom_call.1} parent=11 // pred_fallthru
          _
        // Predicated region
        $region37: #{tpu_custom_call.1} parent=11 // pred_check
          %p391 = pneg %p227
        $region38: #{tpu_custom_call.1} parent=11 // pred_check_branch
          %393 = sbr.rel (%p391) target = $region40
        $region39: #{tpu_custom_call.1} parent=11 // pred_region
          %s395 = ssub.s32 256, 256
          %396 = vsyncadd [#allocation12], %s395
          %s397 = sshll.u32 [#allocation13], 4
          %s398 = int_to_ptr.vmem [resolvable:$true] %s397
          %403 = dma.hbm_to_vmem [thread:$0]  %s8, 256, %s398, [#allocation12], 64, 64, 4
        $region40: #{tpu_custom_call.1} parent=11 // pred_fallthru
          _
        // Predicated region
        $region41: #{tpu_custom_call.1} parent=11 // pred_check
          %p404 = pneg %p248
        $region42: #{tpu_custom_call.1} parent=11 // pred_check_branch
          %406 = sbr.rel (%p404) target = $region44
        $region43: #{tpu_custom_call.1} parent=11 // pred_region
          %s408 = ssub.s32 16, 16
          %409 = vsyncadd [#allocation15], %s408
          %s411 = sshll.u32 [#allocation14], 4
          %s412 = int_to_ptr.vmem [resolvable:$true] %s411
          %414 = dma.hbm_to_vmem [thread:$0]  %s9, 16, %s412, [#allocation15]
        $region44: #{tpu_custom_call.1} parent=11 // pred_fallthru
          _
        // Predicated region
        $region45: #{tpu_custom_call.1} parent=11 // pred_check
          %p415 = pneg %p269
        $region46: #{tpu_custom_call.1} parent=11 // pred_check_branch
          %417 = sbr.rel (%p415) target = $region48
        $region47: #{tpu_custom_call.1} parent=11 // pred_region
          _
        $region48: #{tpu_custom_call.1} parent=11 // pred_fallthru
          _
        // Predicated region
        $region49: #{tpu_custom_call.1} parent=11 // pred_check
          %p418 = pneg %p290
        $region50: #{tpu_custom_call.1} parent=11 // pred_check_branch
          %420 = sbr.rel (%p418) target = $region52
        $region51: #{tpu_custom_call.1} parent=11 // pred_region
          _
        $region52: #{tpu_custom_call.1} parent=11 // pred_fallthru
          _
      $region12: #{tpu_custom_call.1} parent=5 // pred_fallthru
        _
      %p421 = scmp.lt.s32.totalorder %s28, 2
      // Predicated region
      $region53: #{tpu_custom_call.1} parent=5 // pred_check
        %p422 = pneg %p421
      $region54: #{tpu_custom_call.1} parent=5 // pred_check_branch
        %424 = sbr.rel (%p422) target = $region56
      $region55: #{tpu_custom_call.1} parent=5 // pred_region
        // Predicated region
        $region57: #{tpu_custom_call.1} parent=55 // pred_check
          %p425 = pneg %p48
        $region58: #{tpu_custom_call.1} parent=55 // pred_check_branch
          %427 = sbr.rel (%p425) target = $region60
        $region59: #{tpu_custom_call.1} parent=55 // pred_region
          %s428 = sand.u32 %s38, 1
          %s429 = scalar_lea.sflag [#allocation3], %s428
          %s430 = sand.u32 %s38, 1
          %s431 = smul.addr %s430, 16
          %s432 = scalar_lea.vmem [#allocation2], %s431
          %s434 = ssub.s32 256, 256
          %435 = vsyncadd %s429, %s434
          %s436 = smul.addr %s28, 2
          %s437 = smul.addr %s436, 128
          %s438 = scalar_lea.hbm %s0, %s437
          %s439 = sshll.u32 %s432, 4
          %s440 = int_to_ptr.vmem [resolvable:$true] %s439
          %445 = dma.hbm_to_vmem [thread:$0]  %s438, 256, %s440, %s429, 128, 128, 8
        $region60: #{tpu_custom_call.1} parent=55 // pred_fallthru
          _
        // Predicated region
        $region61: #{tpu_custom_call.1} parent=55 // pred_check
          %p446 = pneg %p74
        $region62: #{tpu_custom_call.1} parent=55 // pred_check_branch
          %448 = sbr.rel (%p446) target = $region64
        $region63: #{tpu_custom_call.1} parent=55 // pred_region
          %p449 = scmp.lt.s32.totalorder %s28, 1
          %s450 = scalar_select %p449, %s28, 1
          %s451 = scalar_lea.vmem %s1, %s450
        $region64: #{tpu_custom_call.1} parent=55 // pred_fallthru
          _
      $region56: #{tpu_custom_call.1} parent=5 // pred_fallthru
        _
      %p452 = scmp.le.s32.totalorder 1, %s28
      %p453 = scmp.lt.s32.totalorder %s28, 3
      %p454 = pnand %p452, %p453
      %p455 = pneg %p454
      // Predicated region
      $region65: #{tpu_custom_call.1} parent=5 // pred_check
        _
      $region66: #{tpu_custom_call.1} parent=5 // pred_check_branch
        %457 = sbr.rel (%p454) target = $region68
      $region67: #{tpu_custom_call.1} parent=5 // pred_region
        %s458 = ssub.s32 %s28, 1
        %s459 = sand.u32 %s41, 1
        %s460 = scalar_lea.sflag [#allocation3], %s459
        %s461 = sand.u32 %s41, 1
        %s462 = smul.addr %s461, 16
        %s463 = scalar_lea.vmem [#allocation2], %s462
        // Predicated region
        $region69: #{tpu_custom_call.1} parent=67 // pred_check
          %p464 = pneg %p54
        $region70: #{tpu_custom_call.1} parent=67 // pred_check_branch
          %466 = sbr.rel (%p464) target = $region72
        $region71: #{tpu_custom_call.1} parent=67 // pred_region
          %467 = dma.done %s460, 256
        $region72: #{tpu_custom_call.1} parent=67 // pred_fallthru
          _
        // Predicated region
        $region73: #{tpu_custom_call.1} parent=67 // pred_check
          %p468 = pneg %p101
        $region74: #{tpu_custom_call.1} parent=67 // pred_check_branch
          %470 = sbr.rel (%p468) target = $region76
        $region75: #{tpu_custom_call.1} parent=67 // pred_region
          %471 = dma.done [#allocation6], 16
        $region76: #{tpu_custom_call.1} parent=67 // pred_fallthru
          _
        // Predicated region
        $region77: #{tpu_custom_call.1} parent=67 // pred_check
          %p472 = pneg %p122
        $region78: #{tpu_custom_call.1} parent=67 // pred_check_branch
          %474 = sbr.rel (%p472) target = $region80
        $region79: #{tpu_custom_call.1} parent=67 // pred_region
          %475 = dma.done [#allocation6], 16
        $region80: #{tpu_custom_call.1} parent=67 // pred_fallthru
          _
        // Predicated region
        $region81: #{tpu_custom_call.1} parent=67 // pred_check
          %p476 = pneg %p143
        $region82: #{tpu_custom_call.1} parent=67 // pred_check_branch
          %478 = sbr.rel (%p476) target = $region84
        $region83: #{tpu_custom_call.1} parent=67 // pred_region
          %479 = dma.done [#allocation9], 256
        $region84: #{tpu_custom_call.1} parent=67 // pred_fallthru
          _
        // Predicated region
        $region85: #{tpu_custom_call.1} parent=67 // pred_check
          %p480 = pneg %p164
        $region86: #{tpu_custom_call.1} parent=67 // pred_check_branch
          %482 = sbr.rel (%p480) target = $region88
        $region87: #{tpu_custom_call.1} parent=67 // pred_region
          %483 = dma.done [#allocation9], 16
        $region88: #{tpu_custom_call.1} parent=67 // pred_fallthru
          _
        // Predicated region
        $region89: #{tpu_custom_call.1} parent=67 // pred_check
          %p484 = pneg %p206
        $region90: #{tpu_custom_call.1} parent=67 // pred_check_branch
          %486 = sbr.rel (%p484) target = $region92
        $region91: #{tpu_custom_call.1} parent=67 // pred_region
          %487 = dma.done [#allocation12], 16
        $region92: #{tpu_custom_call.1} parent=67 // pred_fallthru
          _
        // Predicated region
        $region93: #{tpu_custom_call.1} parent=67 // pred_check
          %p488 = pneg %p227
        $region94: #{tpu_custom_call.1} parent=67 // pred_check_branch
          %490 = sbr.rel (%p488) target = $region96
        $region95: #{tpu_custom_call.1} parent=67 // pred_region
          %491 = dma.done [#allocation12], 256
        $region96: #{tpu_custom_call.1} parent=67 // pred_fallthru
          _
        // Predicated region
        $region97: #{tpu_custom_call.1} parent=67 // pred_check
          %p492 = pneg %p248
        $region98: #{tpu_custom_call.1} parent=67 // pred_check_branch
          %494 = sbr.rel (%p492) target = $region100
        $region99: #{tpu_custom_call.1} parent=67 // pred_region
          %495 = dma.done [#allocation15], 16
        $region100: #{tpu_custom_call.1} parent=67 // pred_fallthru
          _
        %s496 = sand.u32 %s41, 1
        %s497 = scalar_lea.sflag [#allocation3], %s496
        %s498 = sand.u32 %s41, 1
        %s499 = smul.addr %s498, 16
        %s500 = scalar_lea.vmem [#allocation2], %s499
        %p501 = pneg %p54
        %p502 = pneg %p51
        %p503 = scmp.lt.s32.totalorder %s33, 1
        %s504 = scalar_select %p503, %s33, 1
        %s505 = scalar_lea.vmem %s1, %s504
        %p506 = pneg %p80
        %p507 = pneg %p77
        %p508 = pneg %p101
        %p509 = pneg %p98
        %p510 = pneg %p122
        %p511 = pneg %p119
        %p512 = pneg %p143
        %p513 = pneg %p140
        %p514 = pneg %p164
        %p515 = pneg %p161
        %p516 = pneg %p185
        %p517 = pneg %p182
        %p518 = pneg %p206
        %p519 = pneg %p203
        %p520 = pneg %p227
        %p521 = pneg %p224
        %p522 = pneg %p248
        %p523 = pneg %p245
        %p524 = pneg %p269
        %p525 = pneg %p266
        %p526 = pneg %p290
        %p527 = pneg %p287
        %p528 = pneg %p316
        %p529 = pneg %p313
        %s530 = sand.u32 %s303, 1
        %s531 = scalar_lea.sflag [#allocation4], %s530
        %s532 = sand.u32 %s303, 1
        %s533 = smul.addr %s532, 16
        %s534 = scalar_lea.vmem [#allocation16], %s533
        %p535 = scmp.lt.s32.totalorder %s33, 1
        %s536 = scalar_select %p535, %s33, 1
        %s537 = scalar_lea.vmem %s1, %s536
        %v539 = vld [vmem:[%s463] sm:$0xff]
        %v540 = vld [vmem:[%s463 + $0x8] sm:$0xff]
        %v541 = vld [vmem:[#allocation5] sm:$0x1]
        %v542 = vld [vmem:[#allocation7] sm:$0x1]
        %vm543 = vcmask 261120
        %v544 = vsel %vm543, %v539, 0.0
        %545 = vadd.xlane.f32.xlu0 %v544
        %v546 = vpop.xlane.xlu0 %545
        %v547 = vsel %vm543, %v540, 0.0
        %548 = vadd.xlane.f32.xlu0 %v547
        %v549 = vpop.xlane.xlu0 %548
        %v550 = vrcp.pop 32.0
        %v551 = vmul.f32 %v546, %v550
        %v552 = vmul.f32 %v549, %v550
        %v553 = vsub.f32 %v539, %v551
        %v554 = vsub.f32 %v540, %v552
        %v555 = vmul.f32 %v553, %v553
        %v556 = vmul.f32 %v554, %v554
        %v557 = vsel %vm543, %v555, 0.0
        %558 = vadd.xlane.f32.xlu0 %v557
        %v559 = vpop.xlane.xlu0 %558
        %v560 = vsel %vm543, %v556, 0.0
        %561 = vadd.xlane.f32.xlu0 %v560
        %v562 = vpop.xlane.xlu0 %561
        %v563 = vmul.f32 %v559, %v550
        %v564 = vmul.f32 %v562, %v550
        %v565 = vadd.f32 %v563, 1e-06
        %v566 = vadd.f32 %v564, 1e-06
        %v567 = vrsqrt.pop %v565
        %v568 = vrsqrt.pop %v566
        %v569 = vmul.f32 %v553, %v567
        %v570 = vmul.f32 %v554, %v568
        %v572 = vlaneseq
        %v573 = vshrl.u32 %v572, 7
        %v574 = vsub.s32 0, %v573
        %v575 = vrot.slane %v541, %v574
        %v577 = vmul.f32 %v569, %v575
        %v578 = vmul.f32 %v570, %v575
        %v580 = vlaneseq
        %v581 = vshrl.u32 %v580, 7
        %v582 = vsub.s32 0, %v581
        %v583 = vrot.slane %v542, %v582
        %v585 = vadd.f32 %v577, %v583
        %v586 = vadd.f32 %v578, %v583
        %v587 = vld [vmem:[%s537] sm:$0x1]
        %v588 = vpack.c.bf16 %v586, %v585
        %v589 = vld [vmem:[#allocation8] sm:$0xf]
        %v590 = vld [vmem:[#allocation8 + $0x4] sm:$0xf]
        %v591 = vld [vmem:[#allocation8 + $0x8] sm:$0xf]
        %v592 = vld [vmem:[#allocation8 + $0xc] sm:$0xf]
        %v593 = vld [vmem:[#allocation10] sm:$0x1]
        %v595 = vlaneseq
        %v596 = vshrl.u32 %v595, 7
        %v597 = vsub.s32 0, %v596
        %v598 = vrot.slane %v593, %v597
        %v604 = vunpack.c.l.b16 %v589
        %v605 = vunpack.c.l.b16 %v590
        %v606 = vunpack.c.l.b16 %v591
        %v607 = vunpack.c.l.b16 %v592
        %v608 = vpack.c.b16 %v605, %v604
        %v609 = vpack.c.b16 %v607, %v606
        %v613 = vsel %vm543, %v588, 0
        %615 = vmatprep.subr.bf16.mxu0 0
        %616 = vmatpush1.bf16.msra.mxu0 %v608
        %617 = vmatprep.subr.bf16.mxu0 0
        %618 = vmatpush1.bf16.msra.mxu0 %v609
        %619 = vmatprep.subr.bf16.mxu0 0
        %620 = vmatpush1.bf16.msra.mxu0 0
        %621 = vmatprep.subr.bf16.mxu0 0
        %622 = vmatpush1.bf16.msra.mxu0 0
        %623 = vmatprep.subr.bf16.mxu0 0
        %624 = vmatpush1.bf16.msra.mxu0 0
        %625 = vmatprep.subr.bf16.mxu0 0
        %626 = vmatpush1.bf16.msra.mxu0 0
        %627 = vmatprep.subr.bf16.mxu0 0
        %628 = vmatpush1.bf16.msra.mxu0 0
        %629 = vmatprep.subr.bf16.mxu0 0
        %630 = vmatpush1.bf16.msra.mxu0 0
        %631 = vmatprep.subr.bf16.mxu0 0
        %632 = vmatpush1.bf16.msra.mxu0 0
        %633 = vmatprep.subr.bf16.mxu0 0
        %634 = vmatpush1.bf16.msra.mxu0 0
        %635 = vmatprep.subr.bf16.mxu0 0
        %636 = vmatpush1.bf16.msra.mxu0 0
        %637 = vmatprep.subr.bf16.mxu0 0
        %638 = vmatpush1.bf16.msra.mxu0 0
        %639 = vmatprep.subr.bf16.mxu0 0
        %640 = vmatpush1.bf16.msra.mxu0 0
        %641 = vmatprep.subr.bf16.mxu0 0
        %642 = vmatpush1.bf16.msra.mxu0 0
        %643 = vmatprep.subr.bf16.mxu0 0
        %644 = vmatpush1.bf16.msra.mxu0 0
        %645 = vmatprep.subr.bf16.mxu0 0
        %646 = vmatpush1.bf16.msra.mxu0 0
        %647 = vmatprep.mubr.bf16.mxu0 0
        %648 = vmatmul.mubr.bf16.gmra.mrb[0].mxu0 %v613
        %v649 = vpop.f32.mrb[0].mxu0
        %v650 = vadd.f32 %v598, %v649
        %v651 = vpop.f32.mrb[0].mxu0
        %v652 = vpop.f32.mrb[0].mxu0
        %v653 = vadd.f32 %v598, %v652
        %v654 = vpop.f32.mrb[0].mxu0
        %655 = vdwg.mxu0
        %v656 = vld [vmem:[%s6] sm:$0xf]
        %v657 = vld [vmem:[%s6 + $0x4] sm:$0xf]
        %v658 = vld [vmem:[%s6 + $0x8] sm:$0xf]
        %v659 = vld [vmem:[%s6 + $0xc] sm:$0xf]
        %v660 = vld [vmem:[#allocation11] sm:$0x1]
        %v662 = vlaneseq
        %v663 = vshrl.u32 %v662, 7
        %v664 = vsub.s32 0, %v663
        %v665 = vrot.slane %v660, %v664
        %v671 = vunpack.c.l.b16 %v656
        %v672 = vunpack.c.l.b16 %v657
        %v673 = vunpack.c.l.b16 %v658
        %v674 = vunpack.c.l.b16 %v659
        %v675 = vpack.c.b16 %v672, %v671
        %v676 = vpack.c.b16 %v674, %v673
        %679 = vmatprep.subr.bf16.mxu0 0
        %680 = vmatpush1.bf16.msra.mxu0 %v675
        %681 = vmatprep.subr.bf16.mxu0 0
        %682 = vmatpush1.bf16.msra.mxu0 %v676
        %683 = vmatprep.subr.bf16.mxu0 0
        %684 = vmatpush1.bf16.msra.mxu0 0
        %685 = vmatprep.subr.bf16.mxu0 0
        %686 = vmatpush1.bf16.msra.mxu0 0
        %687 = vmatprep.subr.bf16.mxu0 0
        %688 = vmatpush1.bf16.msra.mxu0 0
        %689 = vmatprep.subr.bf16.mxu0 0
        %690 = vmatpush1.bf16.msra.mxu0 0
        %691 = vmatprep.subr.bf16.mxu0 0
        %692 = vmatpush1.bf16.msra.mxu0 0
        %693 = vmatprep.subr.bf16.mxu0 0
        %694 = vmatpush1.bf16.msra.mxu0 0
        %695 = vmatprep.subr.bf16.mxu0 0
        %696 = vmatpush1.bf16.msra.mxu0 0
        %697 = vmatprep.subr.bf16.mxu0 0
        %698 = vmatpush1.bf16.msra.mxu0 0
        %699 = vmatprep.subr.bf16.mxu0 0
        %700 = vmatpush1.bf16.msra.mxu0 0
        %701 = vmatprep.subr.bf16.mxu0 0
        %702 = vmatpush1.bf16.msra.mxu0 0
        %703 = vmatprep.subr.bf16.mxu0 0
        %704 = vmatpush1.bf16.msra.mxu0 0
        %705 = vmatprep.subr.bf16.mxu0 0
        %706 = vmatpush1.bf16.msra.mxu0 0
        %707 = vmatprep.subr.bf16.mxu0 0
        %708 = vmatpush1.bf16.msra.mxu0 0
        %709 = vmatprep.subr.bf16.mxu0 0
        %710 = vmatpush1.bf16.msra.mxu0 0
        %711 = vmatprep.mubr.bf16.mxu0 0
        %712 = vmatmul.mubr.bf16.gmra.mrb[0].mxu0 %v613
        %v713 = vpop.f32.mrb[0].mxu0
        %v714 = vadd.f32 %v665, %v713
        %v715 = vpop.f32.mrb[0].mxu0
        %v716 = vpop.f32.mrb[0].mxu0
        %v717 = vadd.f32 %v665, %v716
        %v718 = vpop.f32.mrb[0].mxu0
        %719 = vdwg.mxu0
        %v720 = vld [vmem:[#allocation13] sm:$0xf]
        %v721 = vld [vmem:[#allocation13 + $0x4] sm:$0xf]
        %v722 = vld [vmem:[#allocation13 + $0x8] sm:$0xf]
        %v723 = vld [vmem:[#allocation13 + $0xc] sm:$0xf]
        %v724 = vld [vmem:[#allocation14] sm:$0x1]
        %v726 = vlaneseq
        %v727 = vshrl.u32 %v726, 7
        %v728 = vsub.s32 0, %v727
        %v729 = vrot.slane %v724, %v728
        %v735 = vunpack.c.l.b16 %v720
        %v736 = vunpack.c.l.b16 %v721
        %v737 = vunpack.c.l.b16 %v722
        %v738 = vunpack.c.l.b16 %v723
        %v739 = vpack.c.b16 %v736, %v735
        %v740 = vpack.c.b16 %v738, %v737
        %743 = vmatprep.subr.bf16.mxu0 0
        %744 = vmatpush1.bf16.msra.mxu0 %v739
        %745 = vmatprep.subr.bf16.mxu0 0
        %746 = vmatpush1.bf16.msra.mxu0 %v740
        %747 = vmatprep.subr.bf16.mxu0 0
        %748 = vmatpush1.bf16.msra.mxu0 0
        %749 = vmatprep.subr.bf16.mxu0 0
        %750 = vmatpush1.bf16.msra.mxu0 0
        %751 = vmatprep.subr.bf16.mxu0 0
        %752 = vmatpush1.bf16.msra.mxu0 0
        %753 = vmatprep.subr.bf16.mxu0 0
        %754 = vmatpush1.bf16.msra.mxu0 0
        %755 = vmatprep.subr.bf16.mxu0 0
        %756 = vmatpush1.bf16.msra.mxu0 0
        %757 = vmatprep.subr.bf16.mxu0 0
        %758 = vmatpush1.bf16.msra.mxu0 0
        %759 = vmatprep.subr.bf16.mxu0 0
        %760 = vmatpush1.bf16.msra.mxu0 0
        %761 = vmatprep.subr.bf16.mxu0 0
        %762 = vmatpush1.bf16.msra.mxu0 0
        %763 = vmatprep.subr.bf16.mxu0 0
        %764 = vmatpush1.bf16.msra.mxu0 0
        %765 = vmatprep.subr.bf16.mxu0 0
        %766 = vmatpush1.bf16.msra.mxu0 0
        %767 = vmatprep.subr.bf16.mxu0 0
        %768 = vmatpush1.bf16.msra.mxu0 0
        %769 = vmatprep.subr.bf16.mxu0 0
        %770 = vmatpush1.bf16.msra.mxu0 0
        %771 = vmatprep.subr.bf16.mxu0 0
        %772 = vmatpush1.bf16.msra.mxu0 0
        %773 = vmatprep.subr.bf16.mxu0 0
        %774 = vmatpush1.bf16.msra.mxu0 0
        %775 = vmatprep.mubr.bf16.mxu0 0
        %776 = vmatmul.mubr.bf16.gmra.mrb[0].mxu0 %v613
        %v777 = vpop.f32.mrb[0].mxu0
        %v778 = vadd.f32 %v729, %v777
        %v779 = vpop.f32.mrb[0].mxu0
        %v780 = vpop.f32.mrb[0].mxu0
        %v781 = vadd.f32 %v729, %v780
        %v782 = vpop.f32.mrb[0].mxu0
        %783 = vdwg.mxu0
        %v784 = vpack.c.bf16 %v653, %v650
        %v785 = vpack.c.bf16 %v717, %v714
        %v786 = vpack.c.bf16 %v781, %v778
        %vm787 = vcmask 64512
        %v789 = vsel %vm787, %v784, 0
        %v792 = vsel %vm787, %v785, 0
        %794 = vmatprep.subr.bf16.mxu0 0
        %795 = vmatpush1.bf16.xpose.msra.mxu0 %v792
        %796 = vmatprep.subr.bf16.mxu0 0
        %797 = vmatpush1.bf16.xpose.msra.mxu0 0
        %798 = vmatprep.subr.bf16.mxu0 0
        %799 = vmatpush1.bf16.xpose.msra.mxu0 0
        %800 = vmatprep.subr.bf16.mxu0 0
        %801 = vmatpush1.bf16.xpose.msra.mxu0 0
        %802 = vmatprep.subr.bf16.mxu0 0
        %803 = vmatpush1.bf16.xpose.msra.mxu0 0
        %804 = vmatprep.subr.bf16.mxu0 0
        %805 = vmatpush1.bf16.xpose.msra.mxu0 0
        %806 = vmatprep.subr.bf16.mxu0 0
        %807 = vmatpush1.bf16.xpose.msra.mxu0 0
        %808 = vmatprep.subr.bf16.mxu0 0
        %809 = vmatpush1.bf16.xpose.msra.mxu0 0
        %810 = vmatprep.subr.bf16.mxu0 0
        %811 = vmatpush1.bf16.xpose.msra.mxu0 0
        %812 = vmatprep.subr.bf16.mxu0 0
        %813 = vmatpush1.bf16.xpose.msra.mxu0 0
        %814 = vmatprep.subr.bf16.mxu0 0
        %815 = vmatpush1.bf16.xpose.msra.mxu0 0
        %816 = vmatprep.subr.bf16.mxu0 0
        %817 = vmatpush1.bf16.xpose.msra.mxu0 0
        %818 = vmatprep.subr.bf16.mxu0 0
        %819 = vmatpush1.bf16.xpose.msra.mxu0 0
        %820 = vmatprep.subr.bf16.mxu0 0
        %821 = vmatpush1.bf16.xpose.msra.mxu0 0
        %822 = vmatprep.subr.bf16.mxu0 0
        %823 = vmatpush1.bf16.xpose.msra.mxu0 0
        %824 = vmatprep.subr.bf16.mxu0 0
        %825 = vmatpush1.bf16.xpose.msra.mxu0 0
        %826 = vmatprep.mubr.bf16.mxu0 0
        %827 = vmatmul.mubr.bf16.gmra.mrb[0].mxu0 %v789
        %v828 = vpop.f32.mrb[0].mxu0
        %v829 = vadd.f32 0.0, %v828
        %v830 = vpop.f32.mrb[0].mxu0
        %v831 = vpop.f32.mrb[0].mxu0
        %v832 = vadd.f32 0.0, %v831
        %v833 = vpop.f32.mrb[0].mxu0
        %834 = vdwg.mxu0
        %v835 = vmul.f32 %v829, 0.35355338
        %v836 = vmul.f32 %v832, 0.35355338
        %v838 = vlaneseq
        %v839 = vshrl.u32 %v838, 7
        %v840 = vsub.s32 0, %v839
        %v841 = vrot.slane %v587, %v840
        %v843 = vadd.f32 %v835, %v841
        %v844 = vadd.f32 %v836, %v841
        %vm845 = vcmask 130048
        %v846 = vsel %vm845, %v843, -inf
        %847 = vmax.xlane.f32.xlu0 %v846
        %v848 = vpop.xlane.xlu0 %847
        %v849 = vsel %vm845, %v844, -inf
        %850 = vmax.xlane.f32.xlu0 %v849
        %v851 = vpop.xlane.xlu0 %850
        %v852 = vsub.f32 %v843, %v848
        %v853 = vsub.f32 %v844, %v851
        %v854 = vmul.f32 %v852, 1.442695
        %v855 = vpow.pop %v854
        %v856 = vmul.f32 %v853, 1.442695
        %v857 = vpow.pop %v856
        %v858 = vsel %vm845, %v855, 0.0
        %859 = vadd.xlane.f32.xlu0 %v858
        %v860 = vpop.xlane.xlu0 %859
        %v861 = vsel %vm845, %v857, 0.0
        %862 = vadd.xlane.f32.xlu0 %v861
        %v863 = vpop.xlane.xlu0 %862
        %v864 = vrcp.pop %v860
        %v865 = vrcp.pop %v863
        %v866 = vmul.f32 %v855, %v864
        %v867 = vmul.f32 %v857, %v865
        %v868 = vpack.c.bf16 %v867, %v866
        %v870 = vsel %vm845, %v868, 0
        %872 = vmatprep.subr.bf16.mxu0 0
        %873 = vmatpush1.bf16.msra.mxu0 %v786
        %874 = vmatprep.subr.bf16.mxu0 0
        %875 = vmatpush1.bf16.msra.mxu0 0
        %876 = vmatprep.subr.bf16.mxu0 0
        %877 = vmatpush1.bf16.msra.mxu0 0
        %878 = vmatprep.subr.bf16.mxu0 0
        %879 = vmatpush1.bf16.msra.mxu0 0
        %880 = vmatprep.subr.bf16.mxu0 0
        %881 = vmatpush1.bf16.msra.mxu0 0
        %882 = vmatprep.subr.bf16.mxu0 0
        %883 = vmatpush1.bf16.msra.mxu0 0
        %884 = vmatprep.subr.bf16.mxu0 0
        %885 = vmatpush1.bf16.msra.mxu0 0
        %886 = vmatprep.subr.bf16.mxu0 0
        %887 = vmatpush1.bf16.msra.mxu0 0
        %888 = vmatprep.subr.bf16.mxu0 0
        %889 = vmatpush1.bf16.msra.mxu0 0
        %890 = vmatprep.subr.bf16.mxu0 0
        %891 = vmatpush1.bf16.msra.mxu0 0
        %892 = vmatprep.subr.bf16.mxu0 0
        %893 = vmatpush1.bf16.msra.mxu0 0
        %894 = vmatprep.subr.bf16.mxu0 0
        %895 = vmatpush1.bf16.msra.mxu0 0
        %896 = vmatprep.subr.bf16.mxu0 0
        %897 = vmatpush1.bf16.msra.mxu0 0
        %898 = vmatprep.subr.bf16.mxu0 0
        %899 = vmatpush1.bf16.msra.mxu0 0
        %900 = vmatprep.subr.bf16.mxu0 0
        %901 = vmatpush1.bf16.msra.mxu0 0
        %902 = vmatprep.subr.bf16.mxu0 0
        %903 = vmatpush1.bf16.msra.mxu0 0
        %904 = vmatprep.mubr.bf16.mxu0 0
        %905 = vmatmul.mubr.bf16.gmra.mrb[0].mxu0 %v870
        %v906 = vpop.f32.mrb[0].mxu0
        %v907 = vadd.f32 0.0, %v906
        %v908 = vpop.f32.mrb[0].mxu0
        %v909 = vpop.f32.mrb[0].mxu0
        %v910 = vadd.f32 0.0, %v909
        %v911 = vpop.f32.mrb[0].mxu0
        %912 = vdwg.mxu0
        %914 = vrot.lane.b32.xlu0 %v784, 120
        %v915 = vpop.permute.xlu0 %914
        %917 = vrot.lane.b32.xlu0 %v785, 120
        %v918 = vpop.permute.xlu0 %917
        %v920 = vsel %vm787, %v915, 0
        %v923 = vsel %vm787, %v918, 0
        %925 = vmatprep.subr.bf16.mxu0 0
        %926 = vmatpush1.bf16.xpose.msra.mxu0 %v923
        %927 = vmatprep.subr.bf16.mxu0 0
        %928 = vmatpush1.bf16.xpose.msra.mxu0 0
        %929 = vmatprep.subr.bf16.mxu0 0
        %930 = vmatpush1.bf16.xpose.msra.mxu0 0
        %931 = vmatprep.subr.bf16.mxu0 0
        %932 = vmatpush1.bf16.xpose.msra.mxu0 0
        %933 = vmatprep.subr.bf16.mxu0 0
        %934 = vmatpush1.bf16.xpose.msra.mxu0 0
        %935 = vmatprep.subr.bf16.mxu0 0
        %936 = vmatpush1.bf16.xpose.msra.mxu0 0
        %937 = vmatprep.subr.bf16.mxu0 0
        %938 = vmatpush1.bf16.xpose.msra.mxu0 0
        %939 = vmatprep.subr.bf16.mxu0 0
        %940 = vmatpush1.bf16.xpose.msra.mxu0 0
        %941 = vmatprep.subr.bf16.mxu0 0
        %942 = vmatpush1.bf16.xpose.msra.mxu0 0
        %943 = vmatprep.subr.bf16.mxu0 0
        %944 = vmatpush1.bf16.xpose.msra.mxu0 0
        %945 = vmatprep.subr.bf16.mxu0 0
        %946 = vmatpush1.bf16.xpose.msra.mxu0 0
        %947 = vmatprep.subr.bf16.mxu0 0
        %948 = vmatpush1.bf16.xpose.msra.mxu0 0
        %949 = vmatprep.subr.bf16.mxu0 0
        %950 = vmatpush1.bf16.xpose.msra.mxu0 0
        %951 = vmatprep.subr.bf16.mxu0 0
        %952 = vmatpush1.bf16.xpose.msra.mxu0 0
        %953 = vmatprep.subr.bf16.mxu0 0
        %954 = vmatpush1.bf16.xpose.msra.mxu0 0
        %955 = vmatprep.subr.bf16.mxu0 0
        %956 = vmatpush1.bf16.xpose.msra.mxu0 0
        %957 = vmatprep.mubr.bf16.mxu0 0
        %958 = vmatmul.mubr.bf16.gmra.mrb[0].mxu0 %v920
        %v959 = vpop.f32.mrb[0].mxu0
        %v960 = vadd.f32 0.0, %v959
        %v961 = vpop.f32.mrb[0].mxu0
        %v962 = vpop.f32.mrb[0].mxu0
        %v963 = vadd.f32 0.0, %v962
        %v964 = vpop.f32.mrb[0].mxu0
        %965 = vdwg.mxu0
        %v966 = vmul.f32 %v960, 0.35355338
        %v967 = vmul.f32 %v963, 0.35355338
        %v968 = vadd.f32 %v966, %v841
        %v969 = vadd.f32 %v967, %v841
        %v970 = vsel %vm845, %v968, -inf
        %971 = vmax.xlane.f32.xlu0 %v970
        %v972 = vpop.xlane.xlu0 %971
        %v973 = vsel %vm845, %v969, -inf
        %974 = vmax.xlane.f32.xlu0 %v973
        %v975 = vpop.xlane.xlu0 %974
        %v976 = vsub.f32 %v968, %v972
        %v977 = vsub.f32 %v969, %v975
        %v978 = vmul.f32 %v976, 1.442695
        %v979 = vpow.pop %v978
        %v980 = vmul.f32 %v977, 1.442695
        %v981 = vpow.pop %v980
        %v982 = vsel %vm845, %v979, 0.0
        %983 = vadd.xlane.f32.xlu0 %v982
        %v984 = vpop.xlane.xlu0 %983
        %v985 = vsel %vm845, %v981, 0.0
        %986 = vadd.xlane.f32.xlu0 %v985
        %v987 = vpop.xlane.xlu0 %986
        %v988 = vrcp.pop %v984
        %v989 = vrcp.pop %v987
        %v990 = vmul.f32 %v979, %v988
        %v991 = vmul.f32 %v981, %v989
        %v992 = vpack.c.bf16 %v991, %v990
        %994 = vrot.lane.b32.xlu0 %v786, 120
        %v995 = vpop.permute.xlu0 %994
        %v998 = vsel %vm845, %v992, 0
        %1000 = vmatprep.subr.bf16.mxu0 0
        %1001 = vmatpush1.bf16.msra.mxu0 %v995
        %1002 = vmatprep.subr.bf16.mxu0 0
        %1003 = vmatpush1.bf16.msra.mxu0 0
        %1004 = vmatprep.subr.bf16.mxu0 0
        %1005 = vmatpush1.bf16.msra.mxu0 0
        %1006 = vmatprep.subr.bf16.mxu0 0
        %1007 = vmatpush1.bf16.msra.mxu0 0
        %1008 = vmatprep.subr.bf16.mxu0 0
        %1009 = vmatpush1.bf16.msra.mxu0 0
        %1010 = vmatprep.subr.bf16.mxu0 0
        %1011 = vmatpush1.bf16.msra.mxu0 0
        %1012 = vmatprep.subr.bf16.mxu0 0
        %1013 = vmatpush1.bf16.msra.mxu0 0
        %1014 = vmatprep.subr.bf16.mxu0 0
        %1015 = vmatpush1.bf16.msra.mxu0 0
        %1016 = vmatprep.subr.bf16.mxu0 0
        %1017 = vmatpush1.bf16.msra.mxu0 0
        %1018 = vmatprep.subr.bf16.mxu0 0
        %1019 = vmatpush1.bf16.msra.mxu0 0
        %1020 = vmatprep.subr.bf16.mxu0 0
        %1021 = vmatpush1.bf16.msra.mxu0 0
        %1022 = vmatprep.subr.bf16.mxu0 0
        %1023 = vmatpush1.bf16.msra.mxu0 0
        %1024 = vmatprep.subr.bf16.mxu0 0
        %1025 = vmatpush1.bf16.msra.mxu0 0
        %1026 = vmatprep.subr.bf16.mxu0 0
        %1027 = vmatpush1.bf16.msra.mxu0 0
        %1028 = vmatprep.subr.bf16.mxu0 0
        %1029 = vmatpush1.bf16.msra.mxu0 0
        %1030 = vmatprep.subr.bf16.mxu0 0
        %1031 = vmatpush1.bf16.msra.mxu0 0
        %1032 = vmatprep.mubr.bf16.mxu0 0
        %1033 = vmatmul.mubr.bf16.gmra.mrb[0].mxu0 %v998
        %v1034 = vpop.f32.mrb[0].mxu0
        %v1035 = vadd.f32 0.0, %v1034
        %v1036 = vpop.f32.mrb[0].mxu0
        %v1037 = vpop.f32.mrb[0].mxu0
        %v1038 = vadd.f32 0.0, %v1037
        %v1039 = vpop.f32.mrb[0].mxu0
        %1040 = vdwg.mxu0
        %1041 = vrot.lane.b32.xlu0 %v784, 112
        %v1042 = vpop.permute.xlu0 %1041
        %1043 = vrot.lane.b32.xlu0 %v785, 112
        %v1044 = vpop.permute.xlu0 %1043
        %v1046 = vsel %vm787, %v1042, 0
        %v1049 = vsel %vm787, %v1044, 0
        %1051 = vmatprep.subr.bf16.mxu0 0
        %1052 = vmatpush1.bf16.xpose.msra.mxu0 %v1049
        %1053 = vmatprep.subr.bf16.mxu0 0
        %1054 = vmatpush1.bf16.xpose.msra.mxu0 0
        %1055 = vmatprep.subr.bf16.mxu0 0
        %1056 = vmatpush1.bf16.xpose.msra.mxu0 0
        %1057 = vmatprep.subr.bf16.mxu0 0
        %1058 = vmatpush1.bf16.xpose.msra.mxu0 0
        %1059 = vmatprep.subr.bf16.mxu0 0
        %1060 = vmatpush1.bf16.xpose.msra.mxu0 0
        %1061 = vmatprep.subr.bf16.mxu0 0
        %1062 = vmatpush1.bf16.xpose.msra.mxu0 0
        %1063 = vmatprep.subr.bf16.mxu0 0
        %1064 = vmatpush1.bf16.xpose.msra.mxu0 0
        %1065 = vmatprep.subr.bf16.mxu0 0
        %1066 = vmatpush1.bf16.xpose.msra.mxu0 0
        %1067 = vmatprep.subr.bf16.mxu0 0
        %1068 = vmatpush1.bf16.xpose.msra.mxu0 0
        %1069 = vmatprep.subr.bf16.mxu0 0
        %1070 = vmatpush1.bf16.xpose.msra.mxu0 0
        %1071 = vmatprep.subr.bf16.mxu0 0
        %1072 = vmatpush1.bf16.xpose.msra.mxu0 0
        %1073 = vmatprep.subr.bf16.mxu0 0
        %1074 = vmatpush1.bf16.xpose.msra.mxu0 0
        %1075 = vmatprep.subr.bf16.mxu0 0
        %1076 = vmatpush1.bf16.xpose.msra.mxu0 0
        %1077 = vmatprep.subr.bf16.mxu0 0
        %1078 = vmatpush1.bf16.xpose.msra.mxu0 0
        %1079 = vmatprep.subr.bf16.mxu0 0
        %1080 = vmatpush1.bf16.xpose.msra.mxu0 0
        %1081 = vmatprep.subr.bf16.mxu0 0
        %1082 = vmatpush1.bf16.xpose.msra.mxu0 0
        %1083 = vmatprep.mubr.bf16.mxu0 0
        %1084 = vmatmul.mubr.bf16.gmra.mrb[0].mxu0 %v1046
        %v1085 = vpop.f32.mrb[0].mxu0
        %v1086 = vadd.f32 0.0, %v1085
        %v1087 = vpop.f32.mrb[0].mxu0
        %v1088 = vpop.f32.mrb[0].mxu0
        %v1089 = vadd.f32 0.0, %v1088
        %v1090 = vpop.f32.mrb[0].mxu0
        %1091 = vdwg.mxu0
        %v1092 = vmul.f32 %v1086, 0.35355338
        %v1093 = vmul.f32 %v1089, 0.35355338
        %v1094 = vadd.f32 %v1092, %v841
        %v1095 = vadd.f32 %v1093, %v841
        %v1096 = vsel %vm845, %v1094, -inf
        %1097 = vmax.xlane.f32.xlu0 %v1096
        %v1098 = vpop.xlane.xlu0 %1097
        %v1099 = vsel %vm845, %v1095, -inf
        %1100 = vmax.xlane.f32.xlu0 %v1099
        %v1101 = vpop.xlane.xlu0 %1100
        %v1102 = vsub.f32 %v1094, %v1098
        %v1103 = vsub.f32 %v1095, %v1101
        %v1104 = vmul.f32 %v1102, 1.442695
        %v1105 = vpow.pop %v1104
        %v1106 = vmul.f32 %v1103, 1.442695
        %v1107 = vpow.pop %v1106
        %v1108 = vsel %vm845, %v1105, 0.0
        %1109 = vadd.xlane.f32.xlu0 %v1108
        %v1110 = vpop.xlane.xlu0 %1109
        %v1111 = vsel %vm845, %v1107, 0.0
        %1112 = vadd.xlane.f32.xlu0 %v1111
        %v1113 = vpop.xlane.xlu0 %1112
        %v1114 = vrcp.pop %v1110
        %v1115 = vrcp.pop %v1113
        %v1116 = vmul.f32 %v1105, %v1114
        %v1117 = vmul.f32 %v1107, %v1115
        %v1118 = vpack.c.bf16 %v1117, %v1116
        %1119 = vrot.lane.b32.xlu0 %v786, 112
        %v1120 = vpop.permute.xlu0 %1119
        %v1123 = vsel %vm845, %v1118, 0
        %1125 = vmatprep.subr.bf16.mxu0 0
        %1126 = vmatpush1.bf16.msra.mxu0 %v1120
        %1127 = vmatprep.subr.bf16.mxu0 0
        %1128 = vmatpush1.bf16.msra.mxu0 0
        %1129 = vmatprep.subr.bf16.mxu0 0
        %1130 = vmatpush1.bf16.msra.mxu0 0
        %1131 = vmatprep.subr.bf16.mxu0 0
        %1132 = vmatpush1.bf16.msra.mxu0 0
        %1133 = vmatprep.subr.bf16.mxu0 0
        %1134 = vmatpush1.bf16.msra.mxu0 0
        %1135 = vmatprep.subr.bf16.mxu0 0
        %1136 = vmatpush1.bf16.msra.mxu0 0
        %1137 = vmatprep.subr.bf16.mxu0 0
        %1138 = vmatpush1.bf16.msra.mxu0 0
        %1139 = vmatprep.subr.bf16.mxu0 0
        %1140 = vmatpush1.bf16.msra.mxu0 0
        %1141 = vmatprep.subr.bf16.mxu0 0
        %1142 = vmatpush1.bf16.msra.mxu0 0
        %1143 = vmatprep.subr.bf16.mxu0 0
        %1144 = vmatpush1.bf16.msra.mxu0 0
        %1145 = vmatprep.subr.bf16.mxu0 0
        %1146 = vmatpush1.bf16.msra.mxu0 0
        %1147 = vmatprep.subr.bf16.mxu0 0
        %1148 = vmatpush1.bf16.msra.mxu0 0
        %1149 = vmatprep.subr.bf16.mxu0 0
        %1150 = vmatpush1.bf16.msra.mxu0 0
        %1151 = vmatprep.subr.bf16.mxu0 0
        %1152 = vmatpush1.bf16.msra.mxu0 0
        %1153 = vmatprep.subr.bf16.mxu0 0
        %1154 = vmatpush1.bf16.msra.mxu0 0
        %1155 = vmatprep.subr.bf16.mxu0 0
        %1156 = vmatpush1.bf16.msra.mxu0 0
        %1157 = vmatprep.mubr.bf16.mxu0 0
        %1158 = vmatmul.mubr.bf16.gmra.mrb[0].mxu0 %v1123
        %v1159 = vpop.f32.mrb[0].mxu0
        %v1160 = vadd.f32 0.0, %v1159
        %v1161 = vpop.f32.mrb[0].mxu0
        %v1162 = vpop.f32.mrb[0].mxu0
        %v1163 = vadd.f32 0.0, %v1162
        %v1164 = vpop.f32.mrb[0].mxu0
        %1165 = vdwg.mxu0
        %1166 = vrot.lane.b32.xlu0 %v784, 104
        %v1167 = vpop.permute.xlu0 %1166
        %1168 = vrot.lane.b32.xlu0 %v785, 104
        %v1169 = vpop.permute.xlu0 %1168
        %v1171 = vsel %vm787, %v1167, 0
        %v1174 = vsel %vm787, %v1169, 0
        %1176 = vmatprep.subr.bf16.mxu0 0
        %1177 = vmatpush1.bf16.xpose.msra.mxu0 %v1174
        %1178 = vmatprep.subr.bf16.mxu0 0
        %1179 = vmatpush1.bf16.xpose.msra.mxu0 0
        %1180 = vmatprep.subr.bf16.mxu0 0
        %1181 = vmatpush1.bf16.xpose.msra.mxu0 0
        %1182 = vmatprep.subr.bf16.mxu0 0
        %1183 = vmatpush1.bf16.xpose.msra.mxu0 0
        %1184 = vmatprep.subr.bf16.mxu0 0
        %1185 = vmatpush1.bf16.xpose.msra.mxu0 0
        %1186 = vmatprep.subr.bf16.mxu0 0
        %1187 = vmatpush1.bf16.xpose.msra.mxu0 0
        %1188 = vmatprep.subr.bf16.mxu0 0
        %1189 = vmatpush1.bf16.xpose.msra.mxu0 0
        %1190 = vmatprep.subr.bf16.mxu0 0
        %1191 = vmatpush1.bf16.xpose.msra.mxu0 0
        %1192 = vmatprep.subr.bf16.mxu0 0
        %1193 = vmatpush1.bf16.xpose.msra.mxu0 0
        %1194 = vmatprep.subr.bf16.mxu0 0
        %1195 = vmatpush1.bf16.xpose.msra.mxu0 0
        %1196 = vmatprep.subr.bf16.mxu0 0
        %1197 = vmatpush1.bf16.xpose.msra.mxu0 0
        %1198 = vmatprep.subr.bf16.mxu0 0
        %1199 = vmatpush1.bf16.xpose.msra.mxu0 0
        %1200 = vmatprep.subr.bf16.mxu0 0
        %1201 = vmatpush1.bf16.xpose.msra.mxu0 0
        %1202 = vmatprep.subr.bf16.mxu0 0
        %1203 = vmatpush1.bf16.xpose.msra.mxu0 0
        %1204 = vmatprep.subr.bf16.mxu0 0
        %1205 = vmatpush1.bf16.xpose.msra.mxu0 0
        %1206 = vmatprep.subr.bf16.mxu0 0
        %1207 = vmatpush1.bf16.xpose.msra.mxu0 0
        %1208 = vmatprep.mubr.bf16.mxu0 0
        %1209 = vmatmul.mubr.bf16.gmra.mrb[0].mxu0 %v1171
        %v1210 = vpop.f32.mrb[0].mxu0
        %v1211 = vadd.f32 0.0, %v1210
        %v1212 = vpop.f32.mrb[0].mxu0
        %v1213 = vpop.f32.mrb[0].mxu0
        %v1214 = vadd.f32 0.0, %v1213
        %v1215 = vpop.f32.mrb[0].mxu0
        %1216 = vdwg.mxu0
        %v1217 = vmul.f32 %v1211, 0.35355338
        %v1218 = vmul.f32 %v1214, 0.35355338
        %v1219 = vadd.f32 %v1217, %v841
        %v1220 = vadd.f32 %v1218, %v841
        %v1221 = vsel %vm845, %v1219, -inf
        %1222 = vmax.xlane.f32.xlu0 %v1221
        %v1223 = vpop.xlane.xlu0 %1222
        %v1224 = vsel %vm845, %v1220, -inf
        %1225 = vmax.xlane.f32.xlu0 %v1224
        %v1226 = vpop.xlane.xlu0 %1225
        %v1227 = vsub.f32 %v1219, %v1223
        %v1228 = vsub.f32 %v1220, %v1226
        %v1229 = vmul.f32 %v1227, 1.442695
        %v1230 = vpow.pop %v1229
        %v1231 = vmul.f32 %v1228, 1.442695
        %v1232 = vpow.pop %v1231
        %v1233 = vsel %vm845, %v1230, 0.0
        %1234 = vadd.xlane.f32.xlu0 %v1233
        %v1235 = vpop.xlane.xlu0 %1234
        %v1236 = vsel %vm845, %v1232, 0.0
        %1237 = vadd.xlane.f32.xlu0 %v1236
        %v1238 = vpop.xlane.xlu0 %1237
        %v1239 = vrcp.pop %v1235
        %v1240 = vrcp.pop %v1238
        %v1241 = vmul.f32 %v1230, %v1239
        %v1242 = vmul.f32 %v1232, %v1240
        %v1243 = vpack.c.bf16 %v1242, %v1241
        %1244 = vrot.lane.b32.xlu0 %v786, 104
        %v1245 = vpop.permute.xlu0 %1244
        %v1248 = vsel %vm845, %v1243, 0
        %1250 = vmatprep.subr.bf16.mxu0 0
        %1251 = vmatpush1.bf16.msra.mxu0 %v1245
        %1252 = vmatprep.subr.bf16.mxu0 0
        %1253 = vmatpush1.bf16.msra.mxu0 0
        %1254 = vmatprep.subr.bf16.mxu0 0
        %1255 = vmatpush1.bf16.msra.mxu0 0
        %1256 = vmatprep.subr.bf16.mxu0 0
        %1257 = vmatpush1.bf16.msra.mxu0 0
        %1258 = vmatprep.subr.bf16.mxu0 0
        %1259 = vmatpush1.bf16.msra.mxu0 0
        %1260 = vmatprep.subr.bf16.mxu0 0
        %1261 = vmatpush1.bf16.msra.mxu0 0
        %1262 = vmatprep.subr.bf16.mxu0 0
        %1263 = vmatpush1.bf16.msra.mxu0 0
        %1264 = vmatprep.subr.bf16.mxu0 0
        %1265 = vmatpush1.bf16.msra.mxu0 0
        %1266 = vmatprep.subr.bf16.mxu0 0
        %1267 = vmatpush1.bf16.msra.mxu0 0
        %1268 = vmatprep.subr.bf16.mxu0 0
        %1269 = vmatpush1.bf16.msra.mxu0 0
        %1270 = vmatprep.subr.bf16.mxu0 0
        %1271 = vmatpush1.bf16.msra.mxu0 0
        %1272 = vmatprep.subr.bf16.mxu0 0
        %1273 = vmatpush1.bf16.msra.mxu0 0
        %1274 = vmatprep.subr.bf16.mxu0 0
        %1275 = vmatpush1.bf16.msra.mxu0 0
        %1276 = vmatprep.subr.bf16.mxu0 0
        %1277 = vmatpush1.bf16.msra.mxu0 0
        %1278 = vmatprep.subr.bf16.mxu0 0
        %1279 = vmatpush1.bf16.msra.mxu0 0
        %1280 = vmatprep.subr.bf16.mxu0 0
        %1281 = vmatpush1.bf16.msra.mxu0 0
        %1282 = vmatprep.mubr.bf16.mxu0 0
        %1283 = vmatmul.mubr.bf16.gmra.mrb[0].mxu0 %v1248
        %v1284 = vpop.f32.mrb[0].mxu0
        %v1285 = vadd.f32 0.0, %v1284
        %v1286 = vpop.f32.mrb[0].mxu0
        %v1287 = vpop.f32.mrb[0].mxu0
        %v1288 = vadd.f32 0.0, %v1287
        %v1289 = vpop.f32.mrb[0].mxu0
        %1290 = vdwg.mxu0
        %1293 = vrot.lane.b32.xlu0 %v1035, 8
        %v1294 = vpop.permute.xlu0 %1293
        %1295 = vrot.lane.b32.xlu0 %v1038, 8
        %v1296 = vpop.permute.xlu0 %1295
        %1301 = vrot.lane.b32.xlu0 %v1160, 16
        %v1302 = vpop.permute.xlu0 %1301
        %1303 = vrot.lane.b32.xlu0 %v1163, 16
        %v1304 = vpop.permute.xlu0 %1303
        %1309 = vrot.lane.b32.xlu0 %v1285, 24
        %v1310 = vpop.permute.xlu0 %1309
        %1311 = vrot.lane.b32.xlu0 %v1288, 24
        %v1312 = vpop.permute.xlu0 %1311
        %v1315 = vsel %vm787, %v907, %v1294
        %v1316 = vsel %vm787, %v910, %v1296
        %v1317 = vsel %vm845, %v1315, %v1302
        %v1318 = vsel %vm845, %v1316, %v1304
        %vm1319 = vcmask 195584
        %v1320 = vsel %vm1319, %v1317, %v1310
        %v1321 = vsel %vm1319, %v1318, %v1312
        %v1322 = vpack.c.bf16 %v1321, %v1320
        %v1323 = vld [vmem:[%s10] sm:$0xf]
        %v1324 = vld [vmem:[%s10 + $0x4] sm:$0xf]
        %v1325 = vld [vmem:[%s10 + $0x8] sm:$0xf]
        %v1326 = vld [vmem:[%s10 + $0xc] sm:$0xf]
        %v1327 = vld [vmem:[%s11] sm:$0x1]
        %v1329 = vlaneseq
        %v1330 = vshrl.u32 %v1329, 7
        %v1331 = vsub.s32 0, %v1330
        %v1332 = vrot.slane %v1327, %v1331
        %v1338 = vunpack.c.l.b16 %v1323
        %v1339 = vunpack.c.l.b16 %v1324
        %v1340 = vunpack.c.l.b16 %v1325
        %v1341 = vunpack.c.l.b16 %v1326
        %v1342 = vpack.c.b16 %v1339, %v1338
        %v1343 = vpack.c.b16 %v1341, %v1340
        %v1347 = vsel %vm543, %v1322, 0
        %1349 = vmatprep.subr.bf16.mxu0 0
        %1350 = vmatpush1.bf16.msra.mxu0 %v1342
        %1351 = vmatprep.subr.bf16.mxu0 0
        %1352 = vmatpush1.bf16.msra.mxu0 %v1343
        %1353 = vmatprep.subr.bf16.mxu0 0
        %1354 = vmatpush1.bf16.msra.mxu0 0
        %1355 = vmatprep.subr.bf16.mxu0 0
        %1356 = vmatpush1.bf16.msra.mxu0 0
        %1357 = vmatprep.subr.bf16.mxu0 0
        %1358 = vmatpush1.bf16.msra.mxu0 0
        %1359 = vmatprep.subr.bf16.mxu0 0
        %1360 = vmatpush1.bf16.msra.mxu0 0
        %1361 = vmatprep.subr.bf16.mxu0 0
        %1362 = vmatpush1.bf16.msra.mxu0 0
        %1363 = vmatprep.subr.bf16.mxu0 0
        %1364 = vmatpush1.bf16.msra.mxu0 0
        %1365 = vmatprep.subr.bf16.mxu0 0
        %1366 = vmatpush1.bf16.msra.mxu0 0
        %1367 = vmatprep.subr.bf16.mxu0 0
        %1368 = vmatpush1.bf16.msra.mxu0 0
        %1369 = vmatprep.subr.bf16.mxu0 0
        %1370 = vmatpush1.bf16.msra.mxu0 0
        %1371 = vmatprep.subr.bf16.mxu0 0
        %1372 = vmatpush1.bf16.msra.mxu0 0
        %1373 = vmatprep.subr.bf16.mxu0 0
        %1374 = vmatpush1.bf16.msra.mxu0 0
        %1375 = vmatprep.subr.bf16.mxu0 0
        %1376 = vmatpush1.bf16.msra.mxu0 0
        %1377 = vmatprep.subr.bf16.mxu0 0
        %1378 = vmatpush1.bf16.msra.mxu0 0
        %1379 = vmatprep.subr.bf16.mxu0 0
        %1380 = vmatpush1.bf16.msra.mxu0 0
        %1381 = vmatprep.mubr.bf16.mxu0 0
        %1382 = vmatmul.mubr.bf16.gmra.mrb[0].mxu0 %v1347
        %v1383 = vpop.f32.mrb[0].mxu0
        %v1384 = vadd.f32 %v1332, %v1383
        %v1385 = vpop.f32.mrb[0].mxu0
        %v1386 = vpop.f32.mrb[0].mxu0
        %v1387 = vadd.f32 %v1332, %v1386
        %v1388 = vpop.f32.mrb[0].mxu0
        %1389 = vdwg.mxu0
        %v1390 = vadd.f32 %v1384, %v539
        %v1391 = vadd.f32 %v1387, %v540
        %1392 = vst.msk [vmem:[%s534] sm:$0xff] %vm543, %v1390
        %1393 = vst.msk [vmem:[%s534 + $0x8] sm:$0xff] %vm543, %v1391
        %s1394 = sand.u32 %s303, 1
        %s1395 = scalar_lea.sflag [#allocation4], %s1394
        %s1396 = sand.u32 %s303, 1
        %s1397 = smul.addr %s1396, 16
        %s1398 = scalar_lea.vmem [#allocation16], %s1397
        // Predicated region
        $region101: #{tpu_custom_call.1} parent=67 // pred_check
          %p1399 = pneg %p313
        $region102: #{tpu_custom_call.1} parent=67 // pred_check_branch
          %1401 = sbr.rel (%p1399) target = $region104
        $region103: #{tpu_custom_call.1} parent=67 // pred_region
          %s1403 = ssub.s32 256, 256
          %1404 = vsyncadd %s1395, %s1403
          %s1405 = smul.addr %s33, 2
          %s1406 = smul.addr %s1405, 128
          %s1407 = scalar_lea.hbm %s12, %s1406
          %s1408 = sshll.u32 %s1398, 4
          %s1409 = int_to_ptr.vmem [resolvable:$true] %s1408
          %1414 = dma.vmem_to_hbm [thread:$0]  %s1409, 256, %s1407, %s1395, 128, 128, 8
        $region104: #{tpu_custom_call.1} parent=67 // pred_fallthru
          _
      $region68: #{tpu_custom_call.1} parent=5 // pred_fallthru
        _
      %p1415 = scmp.le.s32.totalorder 2, %s28
      // Predicated region
      $region105: #{tpu_custom_call.1} parent=5 // pred_check
        %p1416 = pneg %p1415
      $region106: #{tpu_custom_call.1} parent=5 // pred_check_branch
        %1418 = sbr.rel (%p1416) target = $region108
      $region107: #{tpu_custom_call.1} parent=5 // pred_region
        %s1419 = ssub.s32 %s28, 2
        // Predicated region
        $region109: #{tpu_custom_call.1} parent=107 // pred_check
          %p1420 = pneg %p319
        $region110: #{tpu_custom_call.1} parent=107 // pred_check_branch
          %1422 = sbr.rel (%p1420) target = $region112
        $region111: #{tpu_custom_call.1} parent=107 // pred_region
          %s1423 = sand.u32 %s304, 1
          %s1424 = scalar_lea.sflag [#allocation4], %s1423
          %s1425 = sand.u32 %s304, 1
          %s1426 = smul.addr %s1425, 16
          %s1427 = scalar_lea.vmem [#allocation16], %s1426
          %1428 = dma.done %s1424, 256
        $region112: #{tpu_custom_call.1} parent=107 // pred_fallthru
          _
      $region108: #{tpu_custom_call.1} parent=5 // pred_fallthru
        _
    $region6: #{tpu_custom_call.1} parent=1 // loop_footer
      %s32 = sadd.s32 1, %s28
    $region7: #{tpu_custom_call.1} parent=1 // loop_footer_branch
      %27 = sbr.rel target = $region3
    $region8: #{tpu_custom_call.1} parent=1 // loop_exit
      _
    %1429 = vsyncpa [#allocation3], 1
    %s1430 = scalar_lea.sflag [#allocation3], 1
    %1431 = vsyncpa %s1430, 1
    %1432 = vsyncpa [#allocation6], 1
    %1433 = vsyncpa [#allocation9], 1
    %1434 = vsyncpa [#allocation12], 1
    %1435 = vsyncpa [#allocation15], 1
    %1436 = vsyncpa [#allocation4], 1
    %s1437 = scalar_lea.sflag [#allocation4], 1
    %1438 = vsyncpa %s1437, 1

</llo_original>
